<compile_context>
chip_gen: v7x
topology: tpu7x:2x2x1
jax: 0.10.0
libtpu: 0.0.40
codegen_flags: <defaults>
</compile_context>

<pallas_src>
import jax
import jax.numpy as jnp
from jax.experimental import pallas as pl
from jax.experimental.pallas import tpu as pltpu

IN_FEATURES = 100 * 100          # 10000
H1, H2, OUT = 256, 64, 1
K_PAD = 10240                    # next multiple of 128 >= 10000
TK = 2048                        # K tile (multiple of 128); 5 grid steps over K
OUT_PAD = 128                    # lane-dense output slab width


def _round_up(n, m):
    return ((n + m - 1) // m) * m


def pongnn_kernel(x_ref, w1_ref, b1_ref, w2_ref, b2_ref, w3_ref, b3_ref,
                  o_ref, acc_ref):
    k = pl.program_id(1)

    @pl.when(k == 0)
    def _():
        acc_ref[...] = jnp.zeros_like(acc_ref)

    # Streamed fc1 reduction: (TB, TK) @ (TK, H1) accumulated in f32.
    acc_ref[...] += jnp.dot(x_ref[...], w1_ref[...],
                            preferred_element_type=jnp.float32)

    @pl.when(k == pl.num_programs(1) - 1)
    def _():
        h = jnp.maximum(acc_ref[...] + b1_ref[...], 0.0)                       # fc1 + ReLU
        h = jnp.maximum(jnp.dot(h, w2_ref[...],
                                preferred_element_type=jnp.float32) + b2_ref[...], 0.0)  # fc2 + ReLU
        # fc3, padded to 128 output lanes -> unmasked, lane-dense store.
        o_ref[...] = jnp.dot(h, w3_ref[...],
                             preferred_element_type=jnp.float32) + b3_ref[...]


def prepare_params(params):
    """One-time padding of torch-layout params for the kernel.

    Input params are stored transposed vs. torch.nn.Linear, i.e. (in, out), so the
    kernel computes y = x @ W + b (same math as torch's x @ W.T + b).
    """
    w1, b1, w2, b2, w3, b3 = params
    w1p = jnp.pad(w1, ((0, K_PAD - IN_FEATURES), (0, 0)))          # zero rows -> math unchanged
    w3p = jnp.pad(w3, ((0, 0), (0, OUT_PAD - OUT)))                 # zero cols -> extra lanes are 0
    b3p = jnp.pad(b3, ((0, 0), (0, OUT_PAD - OUT)))
    return (w1p, b1, w2, b2, w3p, b3p)


def pongnn_forward(x, prepared_params):
    """x: (B, 1, 100, 100) or (B, 100, 100) float32. Returns (B, 1) float32."""
    w1p, b1, w2, b2, w3p, b3p = prepared_params
    B = x.shape[0]
    x2d = x.reshape(B, IN_FEATURES).astype(jnp.float32)

    # Batch tile: multiple of 8 (sublane), capped at 128 (MXU M dimension).
    TB = min(128, _round_up(max(B, 1), 8))
    B_pad = _round_up(B, TB)
    x_pad = jnp.pad(x2d, ((0, B_pad - B), (0, K_PAD - IN_FEATURES)))

    grid = (B_pad // TB, K_PAD // TK)          # (batch tiles, K tiles) -- reduction last

    cost = pl.CostEstimate(
        flops=2 * B_pad * (K_PAD * H1 + H1 * H2 + H2 * OUT_PAD),
        transcendentals=0,
        bytes_accessed=4 * (B_pad * K_PAD + K_PAD * H1 + H1 * H2 + H2 * OUT_PAD
                            + H1 + H2 + OUT_PAD + B_pad * OUT_PAD),
    )

    out_pad = pl.pallas_call(
        pongnn_kernel,
        out_shape=jax.ShapeDtypeStruct((B_pad, OUT_PAD), jnp.float32),
        grid_spec=pltpu.PrefetchScalarGridSpec(
            num_scalar_prefetch=0,
            grid=grid,
            in_specs=[
                pl.BlockSpec((TB, TK), lambda i, k: (i, k)),        # x: stream batch x K tiles
                pl.BlockSpec((TK, H1), lambda i, k: (k, 0)),        # w1: stream K tiles (pipelined)
                pl.BlockSpec((1, H1), lambda i, k: (0, 0)),         # b1: resident
                pl.BlockSpec((H1, H2), lambda i, k: (0, 0)),        # w2: resident
                pl.BlockSpec((1, H2), lambda i, k: (0, 0)),         # b2: resident
                pl.BlockSpec((H2, OUT_PAD), lambda i, k: (0, 0)),   # w3 (padded): resident
                pl.BlockSpec((1, OUT_PAD), lambda i, k: (0, 0)),    # b3 (padded): resident
            ],
            out_specs=pl.BlockSpec((TB, OUT_PAD), lambda i, k: (i, 0)),
            scratch_shapes=[pltpu.VMEM((TB, H1), jnp.float32)],     # fc1 accumulator
        ),
        compiler_params=pltpu.CompilerParams(
            dimension_semantics=("parallel", "arbitrary"),
            vmem_limit_bytes=32 << 20,   # fits v5e/v6e (128 MiB) and v7x (64 MiB)
        ),
        cost_estimate=cost,
    )(x_pad, w1p, b1, w2, b2, w3p, b3p)

    return out_pad[:B, :OUT]


def init_params(key):
    """Deterministic init mimicking torch.nn.Linear default: U(-1/sqrt(fan_in), 1/sqrt(fan_in))."""
    def linear(k, fan_in, fan_out):
        kw, kb = jax.random.split(k)
        bound = float(fan_in) ** -0.5
        w = jax.random.uniform(kw, (fan_in, fan_out), jnp.float32, -bound, bound)
        b = jax.random.uniform(kb, (1, fan_out), jnp.float32, -bound, bound)
        return w, b

    k1, k2, k3 = jax.random.split(key, 3)
    w1, b1 = linear(k1, IN_FEATURES, H1)
    w2, b2 = linear(k2, H1, H2)
    w3, b3 = linear(k3, H2, OUT)
    return (w1, b1, w2, b2, w3, b3)


def pongnn_ref(x, params):
    """Pure-JAX reference of the torch forward pass."""
    B = x.shape[0]
    w1, b1, w2, b2, w3, b3 = params
    h = x.reshape(B, IN_FEATURES).astype(jnp.float32)
    h = jnp.maximum(h @ w1 + b1, 0.0)
    h = jnp.maximum(h @ w2 + b2, 0.0)
    return h @ w3 + b3


if __name__ == "__main__":
    key = jax.random.PRNGKey(0)
    kx, kp = jax.random.split(key)

    batch = 2
    x = jax.random.normal(kx, (batch, 1, 100, 100), jnp.float32)  # NCHW, matches torch x.view(-1, 100*100)
    params = init_params(kp)
    prepped = prepare_params(params)

    out = pongnn_forward(x, prepped)
    out = jax.block_until_ready(out)

    ref = pongnn_ref(x, params)
    assert out.shape == (batch, 1), out.shape
    assert jnp.allclose(out, ref, atol=1e-4, rtol=1e-4), (out, ref)

    print("KERNEL_OK")
</pallas_src>

<mosaic_0001>
module attributes {stable_mosaic.version = 11 : i64} {
  func.func @pongnn_kernel(%arg0: i32, %arg1: i32, %arg2: memref<8x2048xf32, #tpu.memory_space<vmem>>, %arg3: memref<2048x256xf32, #tpu.memory_space<vmem>>, %arg4: memref<1x256xf32, #tpu.memory_space<vmem>>, %arg5: memref<256x64xf32, #tpu.memory_space<vmem>>, %arg6: memref<1x64xf32, #tpu.memory_space<vmem>>, %arg7: memref<64x128xf32, #tpu.memory_space<vmem>>, %arg8: memref<1x128xf32, #tpu.memory_space<vmem>>, %arg9: memref<8x128xf32, #tpu.memory_space<vmem>>, %arg10: memref<8x256xf32, #tpu.memory_space<vmem>>) attributes {dimension_semantics = [#tpu.dimension_semantics<parallel>, #tpu.dimension_semantics<arbitrary>], iteration_bounds = array<i64: 1, 5>, scalar_prefetch = 0 : i64, scratch_operands = 1 : i64, tpu.core_type = #tpu.core_type<tc>, window_params = [{transform_indices = @transform_0, window_bounds = array<i64: 8, 2048>}, {transform_indices = @transform_1, window_bounds = array<i64: 2048, 256>}, {pipeline_mode = #tpu.pipeline_mode<synchronous>, transform_indices = @transform_2, window_bounds = array<i64: 1, 256>}, {pipeline_mode = #tpu.pipeline_mode<synchronous>, transform_indices = @transform_3, window_bounds = array<i64: 256, 64>}, {pipeline_mode = #tpu.pipeline_mode<synchronous>, transform_indices = @transform_4, window_bounds = array<i64: 1, 64>}, {pipeline_mode = #tpu.pipeline_mode<synchronous>, transform_indices = @transform_5, window_bounds = array<i64: 64, 128>}, {pipeline_mode = #tpu.pipeline_mode<synchronous>, transform_indices = @transform_6, window_bounds = array<i64: 1, 128>}, {transform_indices = @transform_7, window_bounds = array<i64: 8, 128>}]} {
    %c0_i32 = arith.constant 0 : i32
    %0 = arith.cmpi eq, %arg1, %c0_i32 : i32
    %1 = arith.extui %0 : i1 to i32
    %c0_i32_0 = arith.constant 0 : i32
    %2 = arith.cmpi ne, %1, %c0_i32_0 : i32
    scf.if %2 {
      %cst_9 = arith.constant 0.000000e+00 : f32
      %12 = vector.broadcast %cst_9 : f32 to vector<8x256xf32>
      %c0_10 = arith.constant 0 : index
      %c0_11 = arith.constant 0 : index
      %13 = vector.load %arg10[%c0_10, %c0_11] : memref<8x256xf32, #tpu.memory_space<vmem>>, vector<8x256xf32>
      tpu.vector_store %arg10[%c0_10, %c0_11], %12 {strides = array<i32>} : memref<8x256xf32, #tpu.memory_space<vmem>>, vector<8x256xf32>,
    } else {
    }
    %c0 = arith.constant 0 : index
    %c0_1 = arith.constant 0 : index
    %3 = vector.load %arg10[%c0, %c0_1] : memref<8x256xf32, #tpu.memory_space<vmem>>, vector<8x256xf32>
    %c0_2 = arith.constant 0 : index
    %c0_3 = arith.constant 0 : index
    %4 = vector.load %arg2[%c0_2, %c0_3] : memref<8x2048xf32, #tpu.memory_space<vmem>>, vector<8x2048xf32>
    %c0_4 = arith.constant 0 : index
    %c0_5 = arith.constant 0 : index
    %5 = vector.load %arg3[%c0_4, %c0_5] : memref<2048x256xf32, #tpu.memory_space<vmem>>, vector<2048x256xf32>
    %cst = arith.constant dense<0.000000e+00> : vector<8x256xf32>
    %6 = tpu.matmul %4, %5, %cst {dimension_numbers = #tpu.dot_dimension_numbers<[1], [0], [0], [1], [0, 0, 1, 1], [], []>} : vector<8x2048xf32>, vector<2048x256xf32>, vector<8x256xf32> -> vector<8x256xf32>
    %7 = arith.addf %3, %6 : vector<8x256xf32>
    %c0_6 = arith.constant 0 : index
    %c0_7 = arith.constant 0 : index
    %8 = vector.load %arg10[%c0_6, %c0_7] : memref<8x256xf32, #tpu.memory_space<vmem>>, vector<8x256xf32>
    tpu.vector_store %arg10[%c0_6, %c0_7], %7 {strides = array<i32>} : memref<8x256xf32, #tpu.memory_space<vmem>>, vector<8x256xf32>,
    %c4_i32 = arith.constant 4 : i32
    %9 = arith.cmpi eq, %arg1, %c4_i32 : i32
    %10 = arith.extui %9 : i1 to i32
    %c0_i32_8 = arith.constant 0 : i32
    %11 = arith.cmpi ne, %10, %c0_i32_8 : i32
    scf.if %11 {
      %c0_9 = arith.constant 0 : index
      %c0_10 = arith.constant 0 : index
      %12 = vector.load %arg10[%c0_9, %c0_10] : memref<8x256xf32, #tpu.memory_space<vmem>>, vector<8x256xf32>
      %c0_11 = arith.constant 0 : index
      %c0_12 = arith.constant 0 : index
      %13 = vector.load %arg4[%c0_11, %c0_12] : memref<1x256xf32, #tpu.memory_space<vmem>>, vector<1x256xf32>
      %14 = vector.broadcast %13 : vector<1x256xf32> to vector<8x256xf32>
      %15 = arith.addf %12, %14 : vector<8x256xf32>
      %cst_13 = arith.constant 0.000000e+00 : f32
      %16 = vector.broadcast %cst_13 : f32 to vector<8x256xf32>
      %17 = arith.maximumf %15, %16 : vector<8x256xf32>
      %c0_14 = arith.constant 0 : index
      %c0_15 = arith.constant 0 : index
      %18 = vector.load %arg5[%c0_14, %c0_15] : memref<256x64xf32, #tpu.memory_space<vmem>>, vector<256x64xf32>
      %cst_16 = arith.constant dense<0.000000e+00> : vector<8x64xf32>
      %19 = tpu.matmul %17, %18, %cst_16 {dimension_numbers = #tpu.dot_dimension_numbers<[1], [0], [0], [1], [0, 0, 1, 1], [], []>} : vector<8x256xf32>, vector<256x64xf32>, vector<8x64xf32> -> vector<8x64xf32>
      %c0_17 = arith.constant 0 : index
      %c0_18 = arith.constant 0 : index
      %20 = vector.load %arg6[%c0_17, %c0_18] : memref<1x64xf32, #tpu.memory_space<vmem>>, vector<1x64xf32>
      %21 = vector.broadcast %20 : vector<1x64xf32> to vector<8x64xf32>
      %22 = arith.addf %19, %21 : vector<8x64xf32>
      %cst_19 = arith.constant 0.000000e+00 : f32
      %23 = vector.broadcast %cst_19 : f32 to vector<8x64xf32>
      %24 = arith.maximumf %22, %23 : vector<8x64xf32>
      %c0_20 = arith.constant 0 : index
      %c0_21 = arith.constant 0 : index
      %25 = vector.load %arg7[%c0_20, %c0_21] : memref<64x128xf32, #tpu.memory_space<vmem>>, vector<64x128xf32>
      %cst_22 = arith.constant dense<0.000000e+00> : vector<8x128xf32>
      %26 = tpu.matmul %24, %25, %cst_22 {dimension_numbers = #tpu.dot_dimension_numbers<[1], [0], [0], [1], [0, 0, 1, 1], [], []>} : vector<8x64xf32>, vector<64x128xf32>, vector<8x128xf32> -> vector<8x128xf32>
      %c0_23 = arith.constant 0 : index
      %c0_24 = arith.constant 0 : index
      %27 = vector.load %arg8[%c0_23, %c0_24] : memref<1x128xf32, #tpu.memory_space<vmem>>, vector<1x128xf32>
      %28 = vector.broadcast %27 : vector<1x128xf32> to vector<8x128xf32>
      %29 = arith.addf %26, %28 : vector<8x128xf32>
      %c0_25 = arith.constant 0 : index
      %c0_26 = arith.constant 0 : index
      %30 = vector.load %arg9[%c0_25, %c0_26] : memref<8x128xf32, #tpu.memory_space<vmem>>, vector<8x128xf32>
      tpu.vector_store %arg9[%c0_25, %c0_26], %29 {strides = array<i32>} : memref<8x128xf32, #tpu.memory_space<vmem>>, vector<8x128xf32>,
    } else {
    }
    return
  }
  func.func @transform_0(%arg0: i32, %arg1: i32) -> (i32, i32) {
    %c0_i32 = arith.constant 0 : i32
    return %arg0, %arg1 : i32, i32
  }
  func.func @transform_1(%arg0: i32, %arg1: i32) -> (i32, i32) {
    %c0_i32 = arith.constant 0 : i32
    %c0_i32_0 = arith.constant 0 : i32
    return %arg1, %c0_i32 : i32, i32
  }
  func.func @transform_2(%arg0: i32, %arg1: i32) -> (i32, i32) {
    %c0_i32 = arith.constant 0 : i32
    %c0_i32_0 = arith.constant 0 : i32
    %c0_i32_1 = arith.constant 0 : i32
    return %c0_i32, %c0_i32_0 : i32, i32
  }
  func.func @transform_3(%arg0: i32, %arg1: i32) -> (i32, i32) {
    %c0_i32 = arith.constant 0 : i32
    %c0_i32_0 = arith.constant 0 : i32
    %c0_i32_1 = arith.constant 0 : i32
    return %c0_i32, %c0_i32_0 : i32, i32
  }
  func.func @transform_4(%arg0: i32, %arg1: i32) -> (i32, i32) {
    %c0_i32 = arith.constant 0 : i32
    %c0_i32_0 = arith.constant 0 : i32
    %c0_i32_1 = arith.constant 0 : i32
    return %c0_i32, %c0_i32_0 : i32, i32
  }
  func.func @transform_5(%arg0: i32, %arg1: i32) -> (i32, i32) {
    %c0_i32 = arith.constant 0 : i32
    %c0_i32_0 = arith.constant 0 : i32
    %c0_i32_1 = arith.constant 0 : i32
    return %c0_i32, %c0_i32_0 : i32, i32
  }
  func.func @transform_6(%arg0: i32, %arg1: i32) -> (i32, i32) {
    %c0_i32 = arith.constant 0 : i32
    %c0_i32_0 = arith.constant 0 : i32
    %c0_i32_1 = arith.constant 0 : i32
    return %c0_i32, %c0_i32_0 : i32, i32
  }
  func.func @transform_7(%arg0: i32, %arg1: i32) -> (i32, i32) {
    %c0_i32 = arith.constant 0 : i32
    %c0_i32_0 = arith.constant 0 : i32
    return %arg0, %c0_i32 : i32, i32
  }
}

</mosaic_0001>

<llo_original>
// kernel: tpu_custom_call.1
$region0: #{tpu_custom_call.1}
  #allocation0 [shape = 'u32[]', space=smem, size = 0x4, offset = 0x4, fixed_abs, tag = 'smem constant byte address 0x4 - core index']
  #allocation1 [shape = 'u32[144,128]{1,0:T(1,128)}', space=vmem, size = 0x12000, scoped, tag = 'internal scratch']
  #allocation2 [shape = 'f32[8,256]{1,0:T(8,128)}', space=vmem, size = 0x2000, scoped, tag = 'scratch operand']
  %s0 = inlined_call_operand.hbm [shape: f32[8,10240], index: 0, kind: input, shape index: {}]
  %s1 = inlined_call_operand.hbm [shape: f32[10240,256], index: 1, kind: input, shape index: {}]
  %s2 = inlined_call_operand.hbm [shape: f32[1,256], index: 2, kind: input, shape index: {}]
  %s3 = inlined_call_operand.vmem [shape: f32[256,64], index: 3, kind: input, shape index: {}]
  %s4 = inlined_call_operand.hbm [shape: f32[1,64], index: 4, kind: input, shape index: {}]
  %s5 = inlined_call_operand.hbm [shape: f32[64,128], index: 5, kind: input, shape index: {}]
  %s6 = inlined_call_operand.hbm [shape: f32[1,128], index: 6, kind: input, shape index: {}]
  %s7 = inlined_call_operand.hbm [shape: f32[8,128], index: 7, kind: output, shape index: {}]
  %s8 = sld [smem:[#allocation0]]
  $region93: #{tpu_custom_call.1} parent=0
    _
  %s10 = ssub.s32 1, %s8
  %s11 = scalar_select 0, %s10, %s8
  $region1: #{tpu_custom_call.1} parent=0
    #allocation3 [shape = 'u8[131072]{0}', space=vmem, size = 0x20000, scoped, tag = 'input window, operand 0']
    #allocation4 [shape = 's32[2]{0}', space=sflag, size = 0x8, scoped, tag = 'scoped memory for tpu_custom_call.1']
    #allocation5 [shape = 's32[2]{0}', space=sflag, size = 0x8, scoped, tag = 'scoped memory for tpu_custom_call.1']
    #allocation6 [shape = 'u8[4194304]{0}', space=vmem, size = 0x400000, scoped, tag = 'input window, operand 1']
    #allocation7 [shape = 's32[2]{0}', space=sflag, size = 0x8, scoped, tag = 'scoped memory for tpu_custom_call.1']
    #allocation8 [shape = 'u8[1024]{0}', space=vmem, size = 0x400, scoped, tag = 'input window, operand 2, single buffered']
    #allocation9 [shape = 'u8[512]{0}', space=vmem, size = 0x400, scoped, tag = 'input window, operand 4, single buffered']
    #allocation10 [shape = 's32[1]{0}', space=sflag, size = 0x4, scoped, tag = 'scoped memory for tpu_custom_call.1']
    #allocation11 [shape = 'u8[32768]{0}', space=vmem, size = 0x8000, scoped, tag = 'input window, operand 5, single buffered']
    #allocation12 [shape = 'u8[512]{0}', space=vmem, size = 0x400, scoped, tag = 'input window, operand 6, single buffered']
    #allocation13 [shape = 's32[1]{0}', space=sflag, size = 0x4, scoped, tag = 'scoped memory for tpu_custom_call.1']
    #allocation14 [shape = 'u8[4096]{0}', space=vmem, size = 0x1000, scoped, tag = 'output window, operand 0, single buffered']
    %12 = vsyncpa [#allocation4], 0
    %s13 = scalar_lea.sflag [#allocation4], 1
    %14 = vsyncpa %s13, 0
    %15 = vsyncpa [#allocation7], 0
    %s16 = scalar_lea.sflag [#allocation7], 1
    %17 = vsyncpa %s16, 0
    %18 = vsyncpa [#allocation10], 0
    %19 = vsyncpa [#allocation13], 0
    %20 = vsyncpa [#allocation5], 0
    loop: start=0, step=1, limit=7
    $region2: #{tpu_custom_call.1} parent=1 // loop_pre_header
      _
    $region3: #{tpu_custom_call.1} parent=1 // loop_header
      %s22 = sphi 0, %s26
      %p23 = scmp.ge.s32.totalorder %s22, 7
      %s29 = sphi 0, %s41
      %s30 = sphi 0, %s37
      %s31 = sphi 0, %s29
      %s32 = sphi 0, %s30
      %s33 = sphi 0, %s31
      %s34 = sphi 0, %s32
      %s46 = sphi 0, %s48
      %s49 = sphi 0, %s46
      %s50 = sphi 0, %s49
      %s66 = sphi 0, %s50
      %s72 = sphi 0, %s74
      %s75 = sphi 0, %s72
      %s76 = sphi 0, %s75
      %s92 = sphi 0, %s76
      %s96 = sphi 0, %s96
      %s98 = sphi 0, %s96
      %s99 = sphi 0, %s98
      %s113 = sphi 0, %s99
      %s117 = sphi 0, %s117
      %s119 = sphi 0, %s117
      %s120 = sphi 0, %s119
      %s134 = sphi 0, %s120
      %s138 = sphi 0, %s138
      %s140 = sphi 0, %s138
      %s141 = sphi 0, %s140
      %s155 = sphi 0, %s141
      %s159 = sphi 0, %s159
      %s161 = sphi 0, %s159
      %s162 = sphi 0, %s161
      %s176 = sphi 0, %s162
      %s180 = sphi 0, %s180
      %s182 = sphi 0, %s180
      %s183 = sphi 0, %s182
      %s197 = sphi 0, %s183
      %s203 = sphi 0, %s205
      %s206 = sphi 0, %s203
      %s207 = sphi 0, %s206
      %s223 = sphi 0, %s207
    $region4: #{tpu_custom_call.1} parent=1 // loop_header_branch
      %25 = sbr.rel (%p23) target = $region8
    $region5: #{tpu_custom_call.1} parent=1 // loop_body
      %s27 = ssub.s32 %s22, 1
      %s28 = ssub.s32 %s22, 2
      %s35 = sadd.s32 1, %s30
      %p36 = scmp.ge.s32.totalorder %s35, 5
      %s37 = scalar_select %p36, 0, %s35
      %s38 = sadd.s32 1, %s29
      %s39 = scalar_select %p36, %s38, %s29
      %p40 = scmp.ge.s32.totalorder %s39, 1
      %s41 = scalar_select %p40, 0, %s39
      %s42 = ssub.s32 %s29, %s41
      %s43 = ssub.s32 %s30, %s37
      %s44 = sor.u32 %s42, %s43
      %p45 = scmp.eq.s32.totalorder %s44, 0
      %s47 = sadd.s32 %s46, 1
      %s48 = scalar_select %p45, %s46, %s47
      %p51 = pneg %p45
      %p52 = scmp.eq.s32.totalorder %s22, 4
      %p53 = por %p51, %p52
      %p54 = scmp.ne.s32.totalorder %s46, %s49
      %p55 = scmp.eq.s32.totalorder %s22, 0
      %p56 = por %p54, %p55
      %p57 = scmp.ne.s32.totalorder %s46, %s49
      %p58 = scmp.eq.s32.totalorder %s27, 4
      %p59 = por %p57, %p58
      %p60 = scmp.ne.s32.totalorder %s49, %s50
      %p61 = scmp.eq.s32.totalorder %s27, 0
      %p62 = por %p60, %p61
      %p63 = scmp.ne.s32.totalorder %s49, %s50
      %p64 = scmp.eq.s32.totalorder %s28, 4
      %p65 = por %p63, %p64
      %p67 = scmp.ne.s32.totalorder %s50, %s66
      %p68 = scmp.eq.s32.totalorder %s28, 0
      %p69 = por %p67, %p68
      %s70 = ssub.s32 %s30, %s37
      %p71 = scmp.eq.s32.totalorder %s70, 0
      %s73 = sadd.s32 %s72, 1
      %s74 = scalar_select %p71, %s72, %s73
      %p77 = pneg %p71
      %p78 = scmp.eq.s32.totalorder %s22, 4
      %p79 = por %p77, %p78
      %p80 = scmp.ne.s32.totalorder %s72, %s75
      %p81 = scmp.eq.s32.totalorder %s22, 0
      %p82 = por %p80, %p81
      %p83 = scmp.ne.s32.totalorder %s72, %s75
      %p84 = scmp.eq.s32.totalorder %s27, 4
      %p85 = por %p83, %p84
      %p86 = scmp.ne.s32.totalorder %s75, %s76
      %p87 = scmp.eq.s32.totalorder %s27, 0
      %p88 = por %p86, %p87
      %p89 = scmp.ne.s32.totalorder %s75, %s76
      %p90 = scmp.eq.s32.totalorder %s28, 4
      %p91 = por %p89, %p90
      %p93 = scmp.ne.s32.totalorder %s76, %s92
      %p94 = scmp.eq.s32.totalorder %s28, 0
      %p95 = por %p93, %p94
      %s97 = sadd.s32 %s96, 1
      %p100 = scmp.eq.s32.totalorder %s22, 4
      %p101 = scmp.ne.s32.totalorder %s96, %s98
      %p102 = scmp.eq.s32.totalorder %s22, 0
      %p103 = por %p101, %p102
      %p104 = scmp.ne.s32.totalorder %s96, %s98
      %p105 = scmp.eq.s32.totalorder %s27, 4
      %p106 = por %p104, %p105
      %p107 = scmp.ne.s32.totalorder %s98, %s99
      %p108 = scmp.eq.s32.totalorder %s27, 0
      %p109 = por %p107, %p108
      %p110 = scmp.ne.s32.totalorder %s98, %s99
      %p111 = scmp.eq.s32.totalorder %s28, 4
      %p112 = por %p110, %p111
      %p114 = scmp.ne.s32.totalorder %s99, %s113
      %p115 = scmp.eq.s32.totalorder %s28, 0
      %p116 = por %p114, %p115
      %s118 = sadd.s32 %s117, 1
      %p121 = scmp.eq.s32.totalorder %s22, 4
      %p122 = scmp.ne.s32.totalorder %s117, %s119
      %p123 = scmp.eq.s32.totalorder %s22, 0
      %p124 = por %p122, %p123
      %p125 = scmp.ne.s32.totalorder %s117, %s119
      %p126 = scmp.eq.s32.totalorder %s27, 4
      %p127 = por %p125, %p126
      %p128 = scmp.ne.s32.totalorder %s119, %s120
      %p129 = scmp.eq.s32.totalorder %s27, 0
      %p130 = por %p128, %p129
      %p131 = scmp.ne.s32.totalorder %s119, %s120
      %p132 = scmp.eq.s32.totalorder %s28, 4
      %p133 = por %p131, %p132
      %p135 = scmp.ne.s32.totalorder %s120, %s134
      %p136 = scmp.eq.s32.totalorder %s28, 0
      %p137 = por %p135, %p136
      %s139 = sadd.s32 %s138, 1
      %p142 = scmp.eq.s32.totalorder %s22, 4
      %p143 = scmp.ne.s32.totalorder %s138, %s140
      %p144 = scmp.eq.s32.totalorder %s22, 0
      %p145 = por %p143, %p144
      %p146 = scmp.ne.s32.totalorder %s138, %s140
      %p147 = scmp.eq.s32.totalorder %s27, 4
      %p148 = por %p146, %p147
      %p149 = scmp.ne.s32.totalorder %s140, %s141
      %p150 = scmp.eq.s32.totalorder %s27, 0
      %p151 = por %p149, %p150
      %p152 = scmp.ne.s32.totalorder %s140, %s141
      %p153 = scmp.eq.s32.totalorder %s28, 4
      %p154 = por %p152, %p153
      %p156 = scmp.ne.s32.totalorder %s141, %s155
      %p157 = scmp.eq.s32.totalorder %s28, 0
      %p158 = por %p156, %p157
      %s160 = sadd.s32 %s159, 1
      %p163 = scmp.eq.s32.totalorder %s22, 4
      %p164 = scmp.ne.s32.totalorder %s159, %s161
      %p165 = scmp.eq.s32.totalorder %s22, 0
      %p166 = por %p164, %p165
      %p167 = scmp.ne.s32.totalorder %s159, %s161
      %p168 = scmp.eq.s32.totalorder %s27, 4
      %p169 = por %p167, %p168
      %p170 = scmp.ne.s32.totalorder %s161, %s162
      %p171 = scmp.eq.s32.totalorder %s27, 0
      %p172 = por %p170, %p171
      %p173 = scmp.ne.s32.totalorder %s161, %s162
      %p174 = scmp.eq.s32.totalorder %s28, 4
      %p175 = por %p173, %p174
      %p177 = scmp.ne.s32.totalorder %s162, %s176
      %p178 = scmp.eq.s32.totalorder %s28, 0
      %p179 = por %p177, %p178
      %s181 = sadd.s32 %s180, 1
      %p184 = scmp.eq.s32.totalorder %s22, 4
      %p185 = scmp.ne.s32.totalorder %s180, %s182
      %p186 = scmp.eq.s32.totalorder %s22, 0
      %p187 = por %p185, %p186
      %p188 = scmp.ne.s32.totalorder %s180, %s182
      %p189 = scmp.eq.s32.totalorder %s27, 4
      %p190 = por %p188, %p189
      %p191 = scmp.ne.s32.totalorder %s182, %s183
      %p192 = scmp.eq.s32.totalorder %s27, 0
      %p193 = por %p191, %p192
      %p194 = scmp.ne.s32.totalorder %s182, %s183
      %p195 = scmp.eq.s32.totalorder %s28, 4
      %p196 = por %p194, %p195
      %p198 = scmp.ne.s32.totalorder %s183, %s197
      %p199 = scmp.eq.s32.totalorder %s28, 0
      %p200 = por %p198, %p199
      %s201 = ssub.s32 %s29, %s41
      %p202 = scmp.eq.s32.totalorder %s201, 0
      %s204 = sadd.s32 %s203, 1
      %s205 = scalar_select %p202, %s203, %s204
      %p208 = pneg %p202
      %p209 = scmp.eq.s32.totalorder %s22, 4
      %p210 = por %p208, %p209
      %p211 = scmp.ne.s32.totalorder %s203, %s206
      %p212 = scmp.eq.s32.totalorder %s22, 0
      %p213 = por %p211, %p212
      %p214 = scmp.ne.s32.totalorder %s203, %s206
      %p215 = scmp.eq.s32.totalorder %s27, 4
      %p216 = por %p214, %p215
      %p217 = scmp.ne.s32.totalorder %s206, %s207
      %p218 = scmp.eq.s32.totalorder %s27, 0
      %p219 = por %p217, %p218
      %p220 = scmp.ne.s32.totalorder %s206, %s207
      %p221 = scmp.eq.s32.totalorder %s28, 4
      %p222 = por %p220, %p221
      %p224 = scmp.ne.s32.totalorder %s207, %s223
      %p225 = scmp.eq.s32.totalorder %s28, 0
      %p226 = por %p224, %p225
      %p227 = scmp.le.s32.totalorder 1, %s22
      %p228 = scmp.lt.s32.totalorder %s22, 6
      %p229 = pnand %p227, %p228
      %p230 = pneg %p229
      // Predicated region
      $region9: #{tpu_custom_call.1} parent=5 // pred_check
        _
      $region10: #{tpu_custom_call.1} parent=5 // pred_check_branch
        %232 = sbr.rel (%p229) target = $region12
      $region11: #{tpu_custom_call.1} parent=5 // pred_region
        %s233 = ssub.s32 %s22, 1
        // Predicated region
        $region13: #{tpu_custom_call.1} parent=11 // pred_check
          %p234 = pneg %p109
        $region14: #{tpu_custom_call.1} parent=11 // pred_check_branch
          %236 = sbr.rel (%p234) target = $region16
        $region15: #{tpu_custom_call.1} parent=11 // pred_region
          %s238 = ssub.s32 32, 32
          %239 = vsyncadd [#allocation7], %s238
          %s241 = sshll.u32 [#allocation8], 4
          %s242 = int_to_ptr.vmem [resolvable:$true] %s241
          %244 = dma.hbm_to_vmem [thread:$0]  %s2, 32, %s242, [#allocation7]
        $region16: #{tpu_custom_call.1} parent=11 // pred_fallthru
          _
        // Predicated region
        $region17: #{tpu_custom_call.1} parent=11 // pred_check
          %p245 = pneg %p130
        $region18: #{tpu_custom_call.1} parent=11 // pred_check_branch
          %247 = sbr.rel (%p245) target = $region20
        $region19: #{tpu_custom_call.1} parent=11 // pred_region
          _
        $region20: #{tpu_custom_call.1} parent=11 // pred_fallthru
          _
        // Predicated region
        $region21: #{tpu_custom_call.1} parent=11 // pred_check
          %p248 = pneg %p151
        $region22: #{tpu_custom_call.1} parent=11 // pred_check_branch
          %250 = sbr.rel (%p248) target = $region24
        $region23: #{tpu_custom_call.1} parent=11 // pred_region
          %s252 = ssub.s32 16, 16
          %253 = vsyncadd [#allocation10], %s252
          %s255 = sshll.u32 [#allocation9], 4
          %s256 = int_to_ptr.vmem [resolvable:$true] %s255
          %258 = dma.hbm_to_vmem [thread:$0]  %s4, 16, %s256, [#allocation10]
        $region24: #{tpu_custom_call.1} parent=11 // pred_fallthru
          _
        // Predicated region
        $region25: #{tpu_custom_call.1} parent=11 // pred_check
          %p259 = pneg %p172
        $region26: #{tpu_custom_call.1} parent=11 // pred_check_branch
          %261 = sbr.rel (%p259) target = $region28
        $region27: #{tpu_custom_call.1} parent=11 // pred_region
          %s263 = ssub.s32 1024, 1024
          %264 = vsyncadd [#allocation10], %s263
          %s265 = sshll.u32 [#allocation11], 4
          %s266 = int_to_ptr.vmem [resolvable:$true] %s265
          %271 = dma.hbm_to_vmem [thread:$0]  %s5, 1024, %s266, [#allocation10], 128, 128, 8
        $region28: #{tpu_custom_call.1} parent=11 // pred_fallthru
          _
        // Predicated region
        $region29: #{tpu_custom_call.1} parent=11 // pred_check
          %p272 = pneg %p193
        $region30: #{tpu_custom_call.1} parent=11 // pred_check_branch
          %274 = sbr.rel (%p272) target = $region32
        $region31: #{tpu_custom_call.1} parent=11 // pred_region
          %s276 = ssub.s32 16, 16
          %277 = vsyncadd [#allocation13], %s276
          %s279 = sshll.u32 [#allocation12], 4
          %s280 = int_to_ptr.vmem [resolvable:$true] %s279
          %282 = dma.hbm_to_vmem [thread:$0]  %s6, 16, %s280, [#allocation13]
        $region32: #{tpu_custom_call.1} parent=11 // pred_fallthru
          _
      $region12: #{tpu_custom_call.1} parent=5 // pred_fallthru
        _
      %p283 = scmp.lt.s32.totalorder %s22, 5
      // Predicated region
      $region33: #{tpu_custom_call.1} parent=5 // pred_check
        %p284 = pneg %p283
      $region34: #{tpu_custom_call.1} parent=5 // pred_check_branch
        %286 = sbr.rel (%p284) target = $region36
      $region35: #{tpu_custom_call.1} parent=5 // pred_region
        // Predicated region
        $region37: #{tpu_custom_call.1} parent=35 // pred_check
          %p287 = pneg %p56
        $region38: #{tpu_custom_call.1} parent=35 // pred_check_branch
          %289 = sbr.rel (%p287) target = $region40
        $region39: #{tpu_custom_call.1} parent=35 // pred_region
          %s290 = sand.u32 %s46, 1
          %s291 = scalar_lea.sflag [#allocation4], %s290
          %s292 = sand.u32 %s46, 1
          %s293 = smul.addr %s292, 128
          %s294 = scalar_lea.vmem [#allocation3], %s293
          %s295 = smul.u32 16, %s30
          %s297 = ssub.s32 2048, 2048
          %298 = vsyncadd %s291, %s297
          %s299 = smul.addr %s29, 80
          %s300 = sadd.s32 %s295, %s299
          %s301 = smul.addr %s300, 128
          %s302 = scalar_lea.hbm %s0, %s301
          %s304 = sshll.u32 %s294, 4
          %s305 = int_to_ptr.vmem [resolvable:$true] %s304
          %307 = dma.hbm_to_vmem [thread:$0]  %s302, 2048, %s305, %s291
        $region40: #{tpu_custom_call.1} parent=35 // pred_fallthru
          _
        // Predicated region
        $region41: #{tpu_custom_call.1} parent=35 // pred_check
          %p308 = pneg %p82
        $region42: #{tpu_custom_call.1} parent=35 // pred_check_branch
          %310 = sbr.rel (%p308) target = $region44
        $region43: #{tpu_custom_call.1} parent=35 // pred_region
          %s311 = sand.u32 %s22, 1
          %s312 = scalar_lea.sflag [#allocation7], %s311
          %s313 = sand.u32 %s72, 1
          %s314 = smul.addr %s313, 4096
          %s315 = scalar_lea.vmem [#allocation6], %s314
          %s316 = smul.u32 256, %s30
          %s318 = ssub.s32 65536, 65536
          %319 = vsyncadd %s312, %s318
          %s320 = smul.addr %s316, 2
          %s321 = smul.addr %s320, 128
          %s322 = scalar_lea.hbm %s1, %s321
          %s323 = sshll.u32 %s315, 4
          %s324 = int_to_ptr.vmem [resolvable:$true] %s323
          %329 = dma.hbm_to_vmem [thread:$0]  %s322, 65536, %s324, %s312, 256, 256, 16
        $region44: #{tpu_custom_call.1} parent=35 // pred_fallthru
          _
      $region36: #{tpu_custom_call.1} parent=5 // pred_fallthru
        _
      %p330 = scmp.le.s32.totalorder 1, %s22
      %p331 = scmp.lt.s32.totalorder %s22, 6
      %p332 = pnand %p330, %p331
      %p333 = pneg %p332
      // Predicated region
      $region45: #{tpu_custom_call.1} parent=5 // pred_check
        _
      $region46: #{tpu_custom_call.1} parent=5 // pred_check_branch
        %335 = sbr.rel (%p332) target = $region48
      $region47: #{tpu_custom_call.1} parent=5 // pred_region
        %s336 = ssub.s32 %s22, 1
        %s337 = sand.u32 %s49, 1
        %s338 = scalar_lea.sflag [#allocation4], %s337
        %s339 = sand.u32 %s49, 1
        %s340 = smul.addr %s339, 128
        %s341 = scalar_lea.vmem [#allocation3], %s340
        // Predicated region
        $region49: #{tpu_custom_call.1} parent=47 // pred_check
          %p342 = pneg %p62
        $region50: #{tpu_custom_call.1} parent=47 // pred_check_branch
          %344 = sbr.rel (%p342) target = $region52
        $region51: #{tpu_custom_call.1} parent=47 // pred_region
          %345 = dma.done %s338, 2048
        $region52: #{tpu_custom_call.1} parent=47 // pred_fallthru
          _
        %s346 = sand.u32 %s27, 1
        %s347 = scalar_lea.sflag [#allocation7], %s346
        %s348 = sand.u32 %s75, 1
        %s349 = smul.addr %s348, 4096
        %s350 = scalar_lea.vmem [#allocation6], %s349
        // Predicated region
        $region53: #{tpu_custom_call.1} parent=47 // pred_check
          %p351 = pneg %p88
        $region54: #{tpu_custom_call.1} parent=47 // pred_check_branch
          %353 = sbr.rel (%p351) target = $region56
        $region55: #{tpu_custom_call.1} parent=47 // pred_region
          %354 = dma.done %s347, 65536
        $region56: #{tpu_custom_call.1} parent=47 // pred_fallthru
          _
        // Predicated region
        $region57: #{tpu_custom_call.1} parent=47 // pred_check
          %p355 = pneg %p109
        $region58: #{tpu_custom_call.1} parent=47 // pred_check_branch
          %357 = sbr.rel (%p355) target = $region60
        $region59: #{tpu_custom_call.1} parent=47 // pred_region
          %358 = dma.done [#allocation7], 32
        $region60: #{tpu_custom_call.1} parent=47 // pred_fallthru
          _
        // Predicated region
        $region61: #{tpu_custom_call.1} parent=47 // pred_check
          %p359 = pneg %p151
        $region62: #{tpu_custom_call.1} parent=47 // pred_check_branch
          %361 = sbr.rel (%p359) target = $region64
        $region63: #{tpu_custom_call.1} parent=47 // pred_region
          %362 = dma.done [#allocation10], 16
        $region64: #{tpu_custom_call.1} parent=47 // pred_fallthru
          _
        // Predicated region
        $region65: #{tpu_custom_call.1} parent=47 // pred_check
          %p363 = pneg %p172
        $region66: #{tpu_custom_call.1} parent=47 // pred_check_branch
          %365 = sbr.rel (%p363) target = $region68
        $region67: #{tpu_custom_call.1} parent=47 // pred_region
          %366 = dma.done [#allocation10], 1024
        $region68: #{tpu_custom_call.1} parent=47 // pred_fallthru
          _
        // Predicated region
        $region69: #{tpu_custom_call.1} parent=47 // pred_check
          %p367 = pneg %p193
        $region70: #{tpu_custom_call.1} parent=47 // pred_check_branch
          %369 = sbr.rel (%p367) target = $region72
        $region71: #{tpu_custom_call.1} parent=47 // pred_region
          %370 = dma.done [#allocation13], 16
        $region72: #{tpu_custom_call.1} parent=47 // pred_fallthru
          _
        %s371 = sand.u32 %s49, 1
        %s372 = scalar_lea.sflag [#allocation4], %s371
        %s373 = sand.u32 %s49, 1
        %s374 = smul.addr %s373, 128
        %s375 = scalar_lea.vmem [#allocation3], %s374
        %p376 = pneg %p62
        %p377 = pneg %p59
        %s378 = sand.u32 %s27, 1
        %s379 = scalar_lea.sflag [#allocation7], %s378
        %s380 = sand.u32 %s75, 1
        %s381 = smul.addr %s380, 4096
        %s382 = scalar_lea.vmem [#allocation6], %s381
        %p383 = pneg %p88
        %p384 = pneg %p85
        %p385 = pneg %p109
        %p386 = pneg %p106
        %p387 = pneg %p130
        %p388 = pneg %p127
        %p389 = pneg %p151
        %p390 = pneg %p148
        %p391 = pneg %p172
        %p392 = pneg %p169
        %p393 = pneg %p193
        %p394 = pneg %p190
        %p395 = pneg %p219
        %p396 = pneg %p216
        %s397 = smul.u32 16, %s32
        %s398 = smul.u32 256, %s32
        %p399 = scmp.eq.s32.totalorder %s32, 0
        // Predicated region
        $region73: #{tpu_custom_call.1} parent=47 // pred_check
          %p400 = pneg %p399
        $region74: #{tpu_custom_call.1} parent=47 // pred_check_branch
          %402 = sbr.rel (%p400) target = $region76
        $region75: #{tpu_custom_call.1} parent=47 // pred_region
          %403 = vst [vmem:[#allocation2] sm:$0xff] 0.0
          %404 = vst [vmem:[#allocation2 + $0x8] sm:$0xff] 0.0
        $region76: #{tpu_custom_call.1} parent=47 // pred_fallthru
          _
        %v405 = vld [vmem:[#allocation2] sm:$0xff]
        %v406 = vld [vmem:[#allocation2 + $0x8] sm:$0xff]
        %v407 = vld [vmem:[%s341] sm:$0xff]
        %v408 = vld [vmem:[%s341 + $0x8] sm:$0xff]
        %v409 = vld [vmem:[%s341 + $0x10] sm:$0xff]
        %v410 = vld [vmem:[%s341 + $0x18] sm:$0xff]
        %v411 = vld [vmem:[%s341 + $0x20] sm:$0xff]
        %v412 = vld [vmem:[%s341 + $0x28] sm:$0xff]
        %v413 = vld [vmem:[%s341 + $0x30] sm:$0xff]
        %v414 = vld [vmem:[%s341 + $0x38] sm:$0xff]
        %v415 = vld [vmem:[%s341 + $0x40] sm:$0xff]
        %v416 = vld [vmem:[%s341 + $0x48] sm:$0xff]
        %v417 = vld [vmem:[%s341 + $0x50] sm:$0xff]
        %v418 = vld [vmem:[%s341 + $0x58] sm:$0xff]
        %v419 = vld [vmem:[%s341 + $0x60] sm:$0xff]
        %v420 = vld [vmem:[%s341 + $0x68] sm:$0xff]
        %v421 = vld [vmem:[%s341 + $0x70] sm:$0xff]
        %v422 = vld [vmem:[%s341 + $0x78] sm:$0xff]
        %v423 = vld [vmem:[%s350] sm:$0xff]
        %v424 = vld [vmem:[%s350 + $0x8] sm:$0xff]
        %v425 = vld [vmem:[%s350 + $0x10] sm:$0xff]
        %v426 = vld [vmem:[%s350 + $0x18] sm:$0xff]
        %v427 = vld [vmem:[%s350 + $0x20] sm:$0xff]
        %v428 = vld [vmem:[%s350 + $0x28] sm:$0xff]
        %v429 = vld [vmem:[%s350 + $0x30] sm:$0xff]
        %v430 = vld [vmem:[%s350 + $0x38] sm:$0xff]
        %v431 = vld [vmem:[%s350 + $0x40] sm:$0xff]
        %v432 = vld [vmem:[%s350 + $0x48] sm:$0xff]
        %v433 = vld [vmem:[%s350 + $0x50] sm:$0xff]
        %v434 = vld [vmem:[%s350 + $0x58] sm:$0xff]
        %v435 = vld [vmem:[%s350 + $0x60] sm:$0xff]
        %v436 = vld [vmem:[%s350 + $0x68] sm:$0xff]
        %v437 = vld [vmem:[%s350 + $0x70] sm:$0xff]
        %v438 = vld [vmem:[%s350 + $0x78] sm:$0xff]
        %v439 = vld [vmem:[%s350 + $0x80] sm:$0xff]
        %v440 = vld [vmem:[%s350 + $0x88] sm:$0xff]
        %v441 = vld [vmem:[%s350 + $0x90] sm:$0xff]
        %v442 = vld [vmem:[%s350 + $0x98] sm:$0xff]
        %v443 = vld [vmem:[%s350 + $0xa0] sm:$0xff]
        %v444 = vld [vmem:[%s350 + $0xa8] sm:$0xff]
        %v445 = vld [vmem:[%s350 + $0xb0] sm:$0xff]
        %v446 = vld [vmem:[%s350 + $0xb8] sm:$0xff]
        %v447 = vld [vmem:[%s350 + $0xc0] sm:$0xff]
        %v448 = vld [vmem:[%s350 + $0xc8] sm:$0xff]
        %v449 = vld [vmem:[%s350 + $0xd0] sm:$0xff]
        %v450 = vld [vmem:[%s350 + $0xd8] sm:$0xff]
        %v451 = vld [vmem:[%s350 + $0xe0] sm:$0xff]
        %v452 = vld [vmem:[%s350 + $0xe8] sm:$0xff]
        %v453 = vld [vmem:[%s350 + $0xf0] sm:$0xff]
        %v454 = vld [vmem:[%s350 + $0xf8] sm:$0xff]
        %v455 = vld [vmem:[%s350 + $0x100] sm:$0xff]
        %v456 = vld [vmem:[%s350 + $0x108] sm:$0xff]
        %v457 = vld [vmem:[%s350 + $0x110] sm:$0xff]
        %v458 = vld [vmem:[%s350 + $0x118] sm:$0xff]
        %v459 = vld [vmem:[%s350 + $0x120] sm:$0xff]
        %v460 = vld [vmem:[%s350 + $0x128] sm:$0xff]
        %v461 = vld [vmem:[%s350 + $0x130] sm:$0xff]
        %v462 = vld [vmem:[%s350 + $0x138] sm:$0xff]
        %v463 = vld [vmem:[%s350 + $0x140] sm:$0xff]
        %v464 = vld [vmem:[%s350 + $0x148] sm:$0xff]
        %v465 = vld [vmem:[%s350 + $0x150] sm:$0xff]
        %v466 = vld [vmem:[%s350 + $0x158] sm:$0xff]
        %v467 = vld [vmem:[%s350 + $0x160] sm:$0xff]
        %v468 = vld [vmem:[%s350 + $0x168] sm:$0xff]
        %v469 = vld [vmem:[%s350 + $0x170] sm:$0xff]
        %v470 = vld [vmem:[%s350 + $0x178] sm:$0xff]
        %v471 = vld [vmem:[%s350 + $0x180] sm:$0xff]
        %v472 = vld [vmem:[%s350 + $0x188] sm:$0xff]
        %v473 = vld [vmem:[%s350 + $0x190] sm:$0xff]
        %v474 = vld [vmem:[%s350 + $0x198] sm:$0xff]
        %v475 = vld [vmem:[%s350 + $0x1a0] sm:$0xff]
        %v476 = vld [vmem:[%s350 + $0x1a8] sm:$0xff]
        %v477 = vld [vmem:[%s350 + $0x1b0] sm:$0xff]
        %v478 = vld [vmem:[%s350 + $0x1b8] sm:$0xff]
        %v479 = vld [vmem:[%s350 + $0x1c0] sm:$0xff]
        %v480 = vld [vmem:[%s350 + $0x1c8] sm:$0xff]
        %v481 = vld [vmem:[%s350 + $0x1d0] sm:$0xff]
        %v482 = vld [vmem:[%s350 + $0x1d8] sm:$0xff]
        %v483 = vld [vmem:[%s350 + $0x1e0] sm:$0xff]
        %v484 = vld [vmem:[%s350 + $0x1e8] sm:$0xff]
        %v485 = vld [vmem:[%s350 + $0x1f0] sm:$0xff]
        %v486 = vld [vmem:[%s350 + $0x1f8] sm:$0xff]
        %v487 = vld [vmem:[%s350 + $0x200] sm:$0xff]
        %v488 = vld [vmem:[%s350 + $0x208] sm:$0xff]
        %v489 = vld [vmem:[%s350 + $0x210] sm:$0xff]
        %v490 = vld [vmem:[%s350 + $0x218] sm:$0xff]
        %v491 = vld [vmem:[%s350 + $0x220] sm:$0xff]
        %v492 = vld [vmem:[%s350 + $0x228] sm:$0xff]
        %v493 = vld [vmem:[%s350 + $0x230] sm:$0xff]
        %v494 = vld [vmem:[%s350 + $0x238] sm:$0xff]
        %v495 = vld [vmem:[%s350 + $0x240] sm:$0xff]
        %v496 = vld [vmem:[%s350 + $0x248] sm:$0xff]
        %v497 = vld [vmem:[%s350 + $0x250] sm:$0xff]
        %v498 = vld [vmem:[%s350 + $0x258] sm:$0xff]
        %v499 = vld [vmem:[%s350 + $0x260] sm:$0xff]
        %v500 = vld [vmem:[%s350 + $0x268] sm:$0xff]
        %v501 = vld [vmem:[%s350 + $0x270] sm:$0xff]
        %v502 = vld [vmem:[%s350 + $0x278] sm:$0xff]
        %v503 = vld [vmem:[%s350 + $0x280] sm:$0xff]
        %v504 = vld [vmem:[%s350 + $0x288] sm:$0xff]
        %v505 = vld [vmem:[%s350 + $0x290] sm:$0xff]
        %v506 = vld [vmem:[%s350 + $0x298] sm:$0xff]
        %v507 = vld [vmem:[%s350 + $0x2a0] sm:$0xff]
        %v508 = vld [vmem:[%s350 + $0x2a8] sm:$0xff]
        %v509 = vld [vmem:[%s350 + $0x2b0] sm:$0xff]
        %v510 = vld [vmem:[%s350 + $0x2b8] sm:$0xff]
        %v511 = vld [vmem:[%s350 + $0x2c0] sm:$0xff]
        %v512 = vld [vmem:[%s350 + $0x2c8] sm:$0xff]
        %v513 = vld [vmem:[%s350 + $0x2d0] sm:$0xff]
        %v514 = vld [vmem:[%s350 + $0x2d8] sm:$0xff]
        %v515 = vld [vmem:[%s350 + $0x2e0] sm:$0xff]
        %v516 = vld [vmem:[%s350 + $0x2e8] sm:$0xff]
        %v517 = vld [vmem:[%s350 + $0x2f0] sm:$0xff]
        %v518 = vld [vmem:[%s350 + $0x2f8] sm:$0xff]
        %v519 = vld [vmem:[%s350 + $0x300] sm:$0xff]
        %v520 = vld [vmem:[%s350 + $0x308] sm:$0xff]
        %v521 = vld [vmem:[%s350 + $0x310] sm:$0xff]
        %v522 = vld [vmem:[%s350 + $0x318] sm:$0xff]
        %v523 = vld [vmem:[%s350 + $0x320] sm:$0xff]
        %v524 = vld [vmem:[%s350 + $0x328] sm:$0xff]
        %v525 = vld [vmem:[%s350 + $0x330] sm:$0xff]
        %v526 = vld [vmem:[%s350 + $0x338] sm:$0xff]
        %v527 = vld [vmem:[%s350 + $0x340] sm:$0xff]
        %v528 = vld [vmem:[%s350 + $0x348] sm:$0xff]
        %v529 = vld [vmem:[%s350 + $0x350] sm:$0xff]
        %v530 = vld [vmem:[%s350 + $0x358] sm:$0xff]
        %v531 = vld [vmem:[%s350 + $0x360] sm:$0xff]
        %v532 = vld [vmem:[%s350 + $0x368] sm:$0xff]
        %v533 = vld [vmem:[%s350 + $0x370] sm:$0xff]
        %v534 = vld [vmem:[%s350 + $0x378] sm:$0xff]
        %v535 = vld [vmem:[%s350 + $0x380] sm:$0xff]
        %v536 = vld [vmem:[%s350 + $0x388] sm:$0xff]
        %v537 = vld [vmem:[%s350 + $0x390] sm:$0xff]
        %v538 = vld [vmem:[%s350 + $0x398] sm:$0xff]
        %v539 = vld [vmem:[%s350 + $0x3a0] sm:$0xff]
        %v540 = vld [vmem:[%s350 + $0x3a8] sm:$0xff]
        %v541 = vld [vmem:[%s350 + $0x3b0] sm:$0xff]
        %v542 = vld [vmem:[%s350 + $0x3b8] sm:$0xff]
        %v543 = vld [vmem:[%s350 + $0x3c0] sm:$0xff]
        %v544 = vld [vmem:[%s350 + $0x3c8] sm:$0xff]
        %v545 = vld [vmem:[%s350 + $0x3d0] sm:$0xff]
        %v546 = vld [vmem:[%s350 + $0x3d8] sm:$0xff]
        %v547 = vld [vmem:[%s350 + $0x3e0] sm:$0xff]
        %v548 = vld [vmem:[%s350 + $0x3e8] sm:$0xff]
        %v549 = vld [vmem:[%s350 + $0x3f0] sm:$0xff]
        %v550 = vld [vmem:[%s350 + $0x3f8] sm:$0xff]
        %v551 = vld [vmem:[%s350 + $0x400] sm:$0xff]
        %v552 = vld [vmem:[%s350 + $0x408] sm:$0xff]
        %v553 = vld [vmem:[%s350 + $0x410] sm:$0xff]
        %v554 = vld [vmem:[%s350 + $0x418] sm:$0xff]
        %v555 = vld [vmem:[%s350 + $0x420] sm:$0xff]
        %v556 = vld [vmem:[%s350 + $0x428] sm:$0xff]
        %v557 = vld [vmem:[%s350 + $0x430] sm:$0xff]
        %v558 = vld [vmem:[%s350 + $0x438] sm:$0xff]
        %v559 = vld [vmem:[%s350 + $0x440] sm:$0xff]
        %v560 = vld [vmem:[%s350 + $0x448] sm:$0xff]
        %v561 = vld [vmem:[%s350 + $0x450] sm:$0xff]
        %v562 = vld [vmem:[%s350 + $0x458] sm:$0xff]
        %v563 = vld [vmem:[%s350 + $0x460] sm:$0xff]
        %v564 = vld [vmem:[%s350 + $0x468] sm:$0xff]
        %v565 = vld [vmem:[%s350 + $0x470] sm:$0xff]
        %v566 = vld [vmem:[%s350 + $0x478] sm:$0xff]
        %v567 = vld [vmem:[%s350 + $0x480] sm:$0xff]
        %v568 = vld [vmem:[%s350 + $0x488] sm:$0xff]
        %v569 = vld [vmem:[%s350 + $0x490] sm:$0xff]
        %v570 = vld [vmem:[%s350 + $0x498] sm:$0xff]
        %v571 = vld [vmem:[%s350 + $0x4a0] sm:$0xff]
        %v572 = vld [vmem:[%s350 + $0x4a8] sm:$0xff]
        %v573 = vld [vmem:[%s350 + $0x4b0] sm:$0xff]
        %v574 = vld [vmem:[%s350 + $0x4b8] sm:$0xff]
        %v575 = vld [vmem:[%s350 + $0x4c0] sm:$0xff]
        %v576 = vld [vmem:[%s350 + $0x4c8] sm:$0xff]
        %v577 = vld [vmem:[%s350 + $0x4d0] sm:$0xff]
        %v578 = vld [vmem:[%s350 + $0x4d8] sm:$0xff]
        %v579 = vld [vmem:[%s350 + $0x4e0] sm:$0xff]
        %v580 = vld [vmem:[%s350 + $0x4e8] sm:$0xff]
        %v581 = vld [vmem:[%s350 + $0x4f0] sm:$0xff]
        %v582 = vld [vmem:[%s350 + $0x4f8] sm:$0xff]
        %v583 = vld [vmem:[%s350 + $0x500] sm:$0xff]
        %v584 = vld [vmem:[%s350 + $0x508] sm:$0xff]
        %v585 = vld [vmem:[%s350 + $0x510] sm:$0xff]
        %v586 = vld [vmem:[%s350 + $0x518] sm:$0xff]
        %v587 = vld [vmem:[%s350 + $0x520] sm:$0xff]
        %v588 = vld [vmem:[%s350 + $0x528] sm:$0xff]
        %v589 = vld [vmem:[%s350 + $0x530] sm:$0xff]
        %v590 = vld [vmem:[%s350 + $0x538] sm:$0xff]
        %v591 = vld [vmem:[%s350 + $0x540] sm:$0xff]
        %v592 = vld [vmem:[%s350 + $0x548] sm:$0xff]
        %v593 = vld [vmem:[%s350 + $0x550] sm:$0xff]
        %v594 = vld [vmem:[%s350 + $0x558] sm:$0xff]
        %v595 = vld [vmem:[%s350 + $0x560] sm:$0xff]
        %v596 = vld [vmem:[%s350 + $0x568] sm:$0xff]
        %v597 = vld [vmem:[%s350 + $0x570] sm:$0xff]
        %v598 = vld [vmem:[%s350 + $0x578] sm:$0xff]
        %v599 = vld [vmem:[%s350 + $0x580] sm:$0xff]
        %v600 = vld [vmem:[%s350 + $0x588] sm:$0xff]
        %v601 = vld [vmem:[%s350 + $0x590] sm:$0xff]
        %v602 = vld [vmem:[%s350 + $0x598] sm:$0xff]
        %v603 = vld [vmem:[%s350 + $0x5a0] sm:$0xff]
        %v604 = vld [vmem:[%s350 + $0x5a8] sm:$0xff]
        %v605 = vld [vmem:[%s350 + $0x5b0] sm:$0xff]
        %v606 = vld [vmem:[%s350 + $0x5b8] sm:$0xff]
        %v607 = vld [vmem:[%s350 + $0x5c0] sm:$0xff]
        %v608 = vld [vmem:[%s350 + $0x5c8] sm:$0xff]
        %v609 = vld [vmem:[%s350 + $0x5d0] sm:$0xff]
        %v610 = vld [vmem:[%s350 + $0x5d8] sm:$0xff]
        %v611 = vld [vmem:[%s350 + $0x5e0] sm:$0xff]
        %v612 = vld [vmem:[%s350 + $0x5e8] sm:$0xff]
        %v613 = vld [vmem:[%s350 + $0x5f0] sm:$0xff]
        %v614 = vld [vmem:[%s350 + $0x5f8] sm:$0xff]
        %v615 = vld [vmem:[%s350 + $0x600] sm:$0xff]
        %v616 = vld [vmem:[%s350 + $0x608] sm:$0xff]
        %v617 = vld [vmem:[%s350 + $0x610] sm:$0xff]
        %v618 = vld [vmem:[%s350 + $0x618] sm:$0xff]
        %v619 = vld [vmem:[%s350 + $0x620] sm:$0xff]
        %v620 = vld [vmem:[%s350 + $0x628] sm:$0xff]
        %v621 = vld [vmem:[%s350 + $0x630] sm:$0xff]
        %v622 = vld [vmem:[%s350 + $0x638] sm:$0xff]
        %v623 = vld [vmem:[%s350 + $0x640] sm:$0xff]
        %v624 = vld [vmem:[%s350 + $0x648] sm:$0xff]
        %v625 = vld [vmem:[%s350 + $0x650] sm:$0xff]
        %v626 = vld [vmem:[%s350 + $0x658] sm:$0xff]
        %v627 = vld [vmem:[%s350 + $0x660] sm:$0xff]
        %v628 = vld [vmem:[%s350 + $0x668] sm:$0xff]
        %v629 = vld [vmem:[%s350 + $0x670] sm:$0xff]
        %v630 = vld [vmem:[%s350 + $0x678] sm:$0xff]
        %v631 = vld [vmem:[%s350 + $0x680] sm:$0xff]
        %v632 = vld [vmem:[%s350 + $0x688] sm:$0xff]
        %v633 = vld [vmem:[%s350 + $0x690] sm:$0xff]
        %v634 = vld [vmem:[%s350 + $0x698] sm:$0xff]
        %v635 = vld [vmem:[%s350 + $0x6a0] sm:$0xff]
        %v636 = vld [vmem:[%s350 + $0x6a8] sm:$0xff]
        %v637 = vld [vmem:[%s350 + $0x6b0] sm:$0xff]
        %v638 = vld [vmem:[%s350 + $0x6b8] sm:$0xff]
        %v639 = vld [vmem:[%s350 + $0x6c0] sm:$0xff]
        %v640 = vld [vmem:[%s350 + $0x6c8] sm:$0xff]
        %v641 = vld [vmem:[%s350 + $0x6d0] sm:$0xff]
        %v642 = vld [vmem:[%s350 + $0x6d8] sm:$0xff]
        %v643 = vld [vmem:[%s350 + $0x6e0] sm:$0xff]
        %v644 = vld [vmem:[%s350 + $0x6e8] sm:$0xff]
        %v645 = vld [vmem:[%s350 + $0x6f0] sm:$0xff]
        %v646 = vld [vmem:[%s350 + $0x6f8] sm:$0xff]
        %v647 = vld [vmem:[%s350 + $0x700] sm:$0xff]
        %v648 = vld [vmem:[%s350 + $0x708] sm:$0xff]
        %v649 = vld [vmem:[%s350 + $0x710] sm:$0xff]
        %v650 = vld [vmem:[%s350 + $0x718] sm:$0xff]
        %v651 = vld [vmem:[%s350 + $0x720] sm:$0xff]
        %v652 = vld [vmem:[%s350 + $0x728] sm:$0xff]
        %v653 = vld [vmem:[%s350 + $0x730] sm:$0xff]
        %v654 = vld [vmem:[%s350 + $0x738] sm:$0xff]
        %v655 = vld [vmem:[%s350 + $0x740] sm:$0xff]
        %v656 = vld [vmem:[%s350 + $0x748] sm:$0xff]
        %v657 = vld [vmem:[%s350 + $0x750] sm:$0xff]
        %v658 = vld [vmem:[%s350 + $0x758] sm:$0xff]
        %v659 = vld [vmem:[%s350 + $0x760] sm:$0xff]
        %v660 = vld [vmem:[%s350 + $0x768] sm:$0xff]
        %v661 = vld [vmem:[%s350 + $0x770] sm:$0xff]
        %v662 = vld [vmem:[%s350 + $0x778] sm:$0xff]
        %v663 = vld [vmem:[%s350 + $0x780] sm:$0xff]
        %v664 = vld [vmem:[%s350 + $0x788] sm:$0xff]
        %v665 = vld [vmem:[%s350 + $0x790] sm:$0xff]
        %v666 = vld [vmem:[%s350 + $0x798] sm:$0xff]
        %v667 = vld [vmem:[%s350 + $0x7a0] sm:$0xff]
        %v668 = vld [vmem:[%s350 + $0x7a8] sm:$0xff]
        %v669 = vld [vmem:[%s350 + $0x7b0] sm:$0xff]
        %v670 = vld [vmem:[%s350 + $0x7b8] sm:$0xff]
        %v671 = vld [vmem:[%s350 + $0x7c0] sm:$0xff]
        %v672 = vld [vmem:[%s350 + $0x7c8] sm:$0xff]
        %v673 = vld [vmem:[%s350 + $0x7d0] sm:$0xff]
        %v674 = vld [vmem:[%s350 + $0x7d8] sm:$0xff]
        %v675 = vld [vmem:[%s350 + $0x7e0] sm:$0xff]
        %v676 = vld [vmem:[%s350 + $0x7e8] sm:$0xff]
        %v677 = vld [vmem:[%s350 + $0x7f0] sm:$0xff]
        %v678 = vld [vmem:[%s350 + $0x7f8] sm:$0xff]
        %v679 = vld [vmem:[%s350 + $0x800] sm:$0xff]
        %v680 = vld [vmem:[%s350 + $0x808] sm:$0xff]
        %v681 = vld [vmem:[%s350 + $0x810] sm:$0xff]
        %v682 = vld [vmem:[%s350 + $0x818] sm:$0xff]
        %v683 = vld [vmem:[%s350 + $0x820] sm:$0xff]
        %v684 = vld [vmem:[%s350 + $0x828] sm:$0xff]
        %v685 = vld [vmem:[%s350 + $0x830] sm:$0xff]
        %v686 = vld [vmem:[%s350 + $0x838] sm:$0xff]
        %v687 = vld [vmem:[%s350 + $0x840] sm:$0xff]
        %v688 = vld [vmem:[%s350 + $0x848] sm:$0xff]
        %v689 = vld [vmem:[%s350 + $0x850] sm:$0xff]
        %v690 = vld [vmem:[%s350 + $0x858] sm:$0xff]
        %v691 = vld [vmem:[%s350 + $0x860] sm:$0xff]
        %v692 = vld [vmem:[%s350 + $0x868] sm:$0xff]
        %v693 = vld [vmem:[%s350 + $0x870] sm:$0xff]
        %v694 = vld [vmem:[%s350 + $0x878] sm:$0xff]
        %v695 = vld [vmem:[%s350 + $0x880] sm:$0xff]
        %v696 = vld [vmem:[%s350 + $0x888] sm:$0xff]
        %v697 = vld [vmem:[%s350 + $0x890] sm:$0xff]
        %v698 = vld [vmem:[%s350 + $0x898] sm:$0xff]
        %v699 = vld [vmem:[%s350 + $0x8a0] sm:$0xff]
        %v700 = vld [vmem:[%s350 + $0x8a8] sm:$0xff]
        %v701 = vld [vmem:[%s350 + $0x8b0] sm:$0xff]
        %v702 = vld [vmem:[%s350 + $0x8b8] sm:$0xff]
        %v703 = vld [vmem:[%s350 + $0x8c0] sm:$0xff]
        %v704 = vld [vmem:[%s350 + $0x8c8] sm:$0xff]
        %v705 = vld [vmem:[%s350 + $0x8d0] sm:$0xff]
        %v706 = vld [vmem:[%s350 + $0x8d8] sm:$0xff]
        %v707 = vld [vmem:[%s350 + $0x8e0] sm:$0xff]
        %v708 = vld [vmem:[%s350 + $0x8e8] sm:$0xff]
        %v709 = vld [vmem:[%s350 + $0x8f0] sm:$0xff]
        %v710 = vld [vmem:[%s350 + $0x8f8] sm:$0xff]
        %v711 = vld [vmem:[%s350 + $0x900] sm:$0xff]
        %v712 = vld [vmem:[%s350 + $0x908] sm:$0xff]
        %v713 = vld [vmem:[%s350 + $0x910] sm:$0xff]
        %v714 = vld [vmem:[%s350 + $0x918] sm:$0xff]
        %v715 = vld [vmem:[%s350 + $0x920] sm:$0xff]
        %v716 = vld [vmem:[%s350 + $0x928] sm:$0xff]
        %v717 = vld [vmem:[%s350 + $0x930] sm:$0xff]
        %v718 = vld [vmem:[%s350 + $0x938] sm:$0xff]
        %v719 = vld [vmem:[%s350 + $0x940] sm:$0xff]
        %v720 = vld [vmem:[%s350 + $0x948] sm:$0xff]
        %v721 = vld [vmem:[%s350 + $0x950] sm:$0xff]
        %v722 = vld [vmem:[%s350 + $0x958] sm:$0xff]
        %v723 = vld [vmem:[%s350 + $0x960] sm:$0xff]
        %v724 = vld [vmem:[%s350 + $0x968] sm:$0xff]
        %v725 = vld [vmem:[%s350 + $0x970] sm:$0xff]
        %v726 = vld [vmem:[%s350 + $0x978] sm:$0xff]
        %v727 = vld [vmem:[%s350 + $0x980] sm:$0xff]
        %v728 = vld [vmem:[%s350 + $0x988] sm:$0xff]
        %v729 = vld [vmem:[%s350 + $0x990] sm:$0xff]
        %v730 = vld [vmem:[%s350 + $0x998] sm:$0xff]
        %v731 = vld [vmem:[%s350 + $0x9a0] sm:$0xff]
        %v732 = vld [vmem:[%s350 + $0x9a8] sm:$0xff]
        %v733 = vld [vmem:[%s350 + $0x9b0] sm:$0xff]
        %v734 = vld [vmem:[%s350 + $0x9b8] sm:$0xff]
        %v735 = vld [vmem:[%s350 + $0x9c0] sm:$0xff]
        %v736 = vld [vmem:[%s350 + $0x9c8] sm:$0xff]
        %v737 = vld [vmem:[%s350 + $0x9d0] sm:$0xff]
        %v738 = vld [vmem:[%s350 + $0x9d8] sm:$0xff]
        %v739 = vld [vmem:[%s350 + $0x9e0] sm:$0xff]
        %v740 = vld [vmem:[%s350 + $0x9e8] sm:$0xff]
        %v741 = vld [vmem:[%s350 + $0x9f0] sm:$0xff]
        %v742 = vld [vmem:[%s350 + $0x9f8] sm:$0xff]
        %v743 = vld [vmem:[%s350 + $0xa00] sm:$0xff]
        %v744 = vld [vmem:[%s350 + $0xa08] sm:$0xff]
        %v745 = vld [vmem:[%s350 + $0xa10] sm:$0xff]
        %v746 = vld [vmem:[%s350 + $0xa18] sm:$0xff]
        %v747 = vld [vmem:[%s350 + $0xa20] sm:$0xff]
        %v748 = vld [vmem:[%s350 + $0xa28] sm:$0xff]
        %v749 = vld [vmem:[%s350 + $0xa30] sm:$0xff]
        %v750 = vld [vmem:[%s350 + $0xa38] sm:$0xff]
        %v751 = vld [vmem:[%s350 + $0xa40] sm:$0xff]
        %v752 = vld [vmem:[%s350 + $0xa48] sm:$0xff]
        %v753 = vld [vmem:[%s350 + $0xa50] sm:$0xff]
        %v754 = vld [vmem:[%s350 + $0xa58] sm:$0xff]
        %v755 = vld [vmem:[%s350 + $0xa60] sm:$0xff]
        %v756 = vld [vmem:[%s350 + $0xa68] sm:$0xff]
        %v757 = vld [vmem:[%s350 + $0xa70] sm:$0xff]
        %v758 = vld [vmem:[%s350 + $0xa78] sm:$0xff]
        %v759 = vld [vmem:[%s350 + $0xa80] sm:$0xff]
        %v760 = vld [vmem:[%s350 + $0xa88] sm:$0xff]
        %v761 = vld [vmem:[%s350 + $0xa90] sm:$0xff]
        %v762 = vld [vmem:[%s350 + $0xa98] sm:$0xff]
        %v763 = vld [vmem:[%s350 + $0xaa0] sm:$0xff]
        %v764 = vld [vmem:[%s350 + $0xaa8] sm:$0xff]
        %v765 = vld [vmem:[%s350 + $0xab0] sm:$0xff]
        %v766 = vld [vmem:[%s350 + $0xab8] sm:$0xff]
        %v767 = vld [vmem:[%s350 + $0xac0] sm:$0xff]
        %v768 = vld [vmem:[%s350 + $0xac8] sm:$0xff]
        %v769 = vld [vmem:[%s350 + $0xad0] sm:$0xff]
        %v770 = vld [vmem:[%s350 + $0xad8] sm:$0xff]
        %v771 = vld [vmem:[%s350 + $0xae0] sm:$0xff]
        %v772 = vld [vmem:[%s350 + $0xae8] sm:$0xff]
        %v773 = vld [vmem:[%s350 + $0xaf0] sm:$0xff]
        %v774 = vld [vmem:[%s350 + $0xaf8] sm:$0xff]
        %v775 = vld [vmem:[%s350 + $0xb00] sm:$0xff]
        %v776 = vld [vmem:[%s350 + $0xb08] sm:$0xff]
        %v777 = vld [vmem:[%s350 + $0xb10] sm:$0xff]
        %v778 = vld [vmem:[%s350 + $0xb18] sm:$0xff]
        %v779 = vld [vmem:[%s350 + $0xb20] sm:$0xff]
        %v780 = vld [vmem:[%s350 + $0xb28] sm:$0xff]
        %v781 = vld [vmem:[%s350 + $0xb30] sm:$0xff]
        %v782 = vld [vmem:[%s350 + $0xb38] sm:$0xff]
        %v783 = vld [vmem:[%s350 + $0xb40] sm:$0xff]
        %v784 = vld [vmem:[%s350 + $0xb48] sm:$0xff]
        %v785 = vld [vmem:[%s350 + $0xb50] sm:$0xff]
        %v786 = vld [vmem:[%s350 + $0xb58] sm:$0xff]
        %v787 = vld [vmem:[%s350 + $0xb60] sm:$0xff]
        %v788 = vld [vmem:[%s350 + $0xb68] sm:$0xff]
        %v789 = vld [vmem:[%s350 + $0xb70] sm:$0xff]
        %v790 = vld [vmem:[%s350 + $0xb78] sm:$0xff]
        %v791 = vld [vmem:[%s350 + $0xb80] sm:$0xff]
        %v792 = vld [vmem:[%s350 + $0xb88] sm:$0xff]
        %v793 = vld [vmem:[%s350 + $0xb90] sm:$0xff]
        %v794 = vld [vmem:[%s350 + $0xb98] sm:$0xff]
        %v795 = vld [vmem:[%s350 + $0xba0] sm:$0xff]
        %v796 = vld [vmem:[%s350 + $0xba8] sm:$0xff]
        %v797 = vld [vmem:[%s350 + $0xbb0] sm:$0xff]
        %v798 = vld [vmem:[%s350 + $0xbb8] sm:$0xff]
        %v799 = vld [vmem:[%s350 + $0xbc0] sm:$0xff]
        %v800 = vld [vmem:[%s350 + $0xbc8] sm:$0xff]
        %v801 = vld [vmem:[%s350 + $0xbd0] sm:$0xff]
        %v802 = vld [vmem:[%s350 + $0xbd8] sm:$0xff]
        %v803 = vld [vmem:[%s350 + $0xbe0] sm:$0xff]
        %v804 = vld [vmem:[%s350 + $0xbe8] sm:$0xff]
        %v805 = vld [vmem:[%s350 + $0xbf0] sm:$0xff]
        %v806 = vld [vmem:[%s350 + $0xbf8] sm:$0xff]
        %v807 = vld [vmem:[%s350 + $0xc00] sm:$0xff]
        %v808 = vld [vmem:[%s350 + $0xc08] sm:$0xff]
        %v809 = vld [vmem:[%s350 + $0xc10] sm:$0xff]
        %v810 = vld [vmem:[%s350 + $0xc18] sm:$0xff]
        %v811 = vld [vmem:[%s350 + $0xc20] sm:$0xff]
        %v812 = vld [vmem:[%s350 + $0xc28] sm:$0xff]
        %v813 = vld [vmem:[%s350 + $0xc30] sm:$0xff]
        %v814 = vld [vmem:[%s350 + $0xc38] sm:$0xff]
        %v815 = vld [vmem:[%s350 + $0xc40] sm:$0xff]
        %v816 = vld [vmem:[%s350 + $0xc48] sm:$0xff]
        %v817 = vld [vmem:[%s350 + $0xc50] sm:$0xff]
        %v818 = vld [vmem:[%s350 + $0xc58] sm:$0xff]
        %v819 = vld [vmem:[%s350 + $0xc60] sm:$0xff]
        %v820 = vld [vmem:[%s350 + $0xc68] sm:$0xff]
        %v821 = vld [vmem:[%s350 + $0xc70] sm:$0xff]
        %v822 = vld [vmem:[%s350 + $0xc78] sm:$0xff]
        %v823 = vld [vmem:[%s350 + $0xc80] sm:$0xff]
        %v824 = vld [vmem:[%s350 + $0xc88] sm:$0xff]
        %v825 = vld [vmem:[%s350 + $0xc90] sm:$0xff]
        %v826 = vld [vmem:[%s350 + $0xc98] sm:$0xff]
        %v827 = vld [vmem:[%s350 + $0xca0] sm:$0xff]
        %v828 = vld [vmem:[%s350 + $0xca8] sm:$0xff]
        %v829 = vld [vmem:[%s350 + $0xcb0] sm:$0xff]
        %v830 = vld [vmem:[%s350 + $0xcb8] sm:$0xff]
        %v831 = vld [vmem:[%s350 + $0xcc0] sm:$0xff]
        %v832 = vld [vmem:[%s350 + $0xcc8] sm:$0xff]
        %v833 = vld [vmem:[%s350 + $0xcd0] sm:$0xff]
        %v834 = vld [vmem:[%s350 + $0xcd8] sm:$0xff]
        %v835 = vld [vmem:[%s350 + $0xce0] sm:$0xff]
        %v836 = vld [vmem:[%s350 + $0xce8] sm:$0xff]
        %v837 = vld [vmem:[%s350 + $0xcf0] sm:$0xff]
        %v838 = vld [vmem:[%s350 + $0xcf8] sm:$0xff]
        %v839 = vld [vmem:[%s350 + $0xd00] sm:$0xff]
        %v840 = vld [vmem:[%s350 + $0xd08] sm:$0xff]
        %v841 = vld [vmem:[%s350 + $0xd10] sm:$0xff]
        %v842 = vld [vmem:[%s350 + $0xd18] sm:$0xff]
        %v843 = vld [vmem:[%s350 + $0xd20] sm:$0xff]
        %v844 = vld [vmem:[%s350 + $0xd28] sm:$0xff]
        %v845 = vld [vmem:[%s350 + $0xd30] sm:$0xff]
        %v846 = vld [vmem:[%s350 + $0xd38] sm:$0xff]
        %v847 = vld [vmem:[%s350 + $0xd40] sm:$0xff]
        %v848 = vld [vmem:[%s350 + $0xd48] sm:$0xff]
        %v849 = vld [vmem:[%s350 + $0xd50] sm:$0xff]
        %v850 = vld [vmem:[%s350 + $0xd58] sm:$0xff]
        %v851 = vld [vmem:[%s350 + $0xd60] sm:$0xff]
        %v852 = vld [vmem:[%s350 + $0xd68] sm:$0xff]
        %v853 = vld [vmem:[%s350 + $0xd70] sm:$0xff]
        %v854 = vld [vmem:[%s350 + $0xd78] sm:$0xff]
        %v855 = vld [vmem:[%s350 + $0xd80] sm:$0xff]
        %v856 = vld [vmem:[%s350 + $0xd88] sm:$0xff]
        %v857 = vld [vmem:[%s350 + $0xd90] sm:$0xff]
        %v858 = vld [vmem:[%s350 + $0xd98] sm:$0xff]
        %v859 = vld [vmem:[%s350 + $0xda0] sm:$0xff]
        %v860 = vld [vmem:[%s350 + $0xda8] sm:$0xff]
        %v861 = vld [vmem:[%s350 + $0xdb0] sm:$0xff]
        %v862 = vld [vmem:[%s350 + $0xdb8] sm:$0xff]
        %v863 = vld [vmem:[%s350 + $0xdc0] sm:$0xff]
        %v864 = vld [vmem:[%s350 + $0xdc8] sm:$0xff]
        %v865 = vld [vmem:[%s350 + $0xdd0] sm:$0xff]
        %v866 = vld [vmem:[%s350 + $0xdd8] sm:$0xff]
        %v867 = vld [vmem:[%s350 + $0xde0] sm:$0xff]
        %v868 = vld [vmem:[%s350 + $0xde8] sm:$0xff]
        %v869 = vld [vmem:[%s350 + $0xdf0] sm:$0xff]
        %v870 = vld [vmem:[%s350 + $0xdf8] sm:$0xff]
        %v871 = vld [vmem:[%s350 + $0xe00] sm:$0xff]
        %v872 = vld [vmem:[%s350 + $0xe08] sm:$0xff]
        %v873 = vld [vmem:[%s350 + $0xe10] sm:$0xff]
        %v874 = vld [vmem:[%s350 + $0xe18] sm:$0xff]
        %v875 = vld [vmem:[%s350 + $0xe20] sm:$0xff]
        %v876 = vld [vmem:[%s350 + $0xe28] sm:$0xff]
        %v877 = vld [vmem:[%s350 + $0xe30] sm:$0xff]
        %v878 = vld [vmem:[%s350 + $0xe38] sm:$0xff]
        %v879 = vld [vmem:[%s350 + $0xe40] sm:$0xff]
        %v880 = vld [vmem:[%s350 + $0xe48] sm:$0xff]
        %v881 = vld [vmem:[%s350 + $0xe50] sm:$0xff]
        %v882 = vld [vmem:[%s350 + $0xe58] sm:$0xff]
        %v883 = vld [vmem:[%s350 + $0xe60] sm:$0xff]
        %v884 = vld [vmem:[%s350 + $0xe68] sm:$0xff]
        %v885 = vld [vmem:[%s350 + $0xe70] sm:$0xff]
        %v886 = vld [vmem:[%s350 + $0xe78] sm:$0xff]
        %v887 = vld [vmem:[%s350 + $0xe80] sm:$0xff]
        %v888 = vld [vmem:[%s350 + $0xe88] sm:$0xff]
        %v889 = vld [vmem:[%s350 + $0xe90] sm:$0xff]
        %v890 = vld [vmem:[%s350 + $0xe98] sm:$0xff]
        %v891 = vld [vmem:[%s350 + $0xea0] sm:$0xff]
        %v892 = vld [vmem:[%s350 + $0xea8] sm:$0xff]
        %v893 = vld [vmem:[%s350 + $0xeb0] sm:$0xff]
        %v894 = vld [vmem:[%s350 + $0xeb8] sm:$0xff]
        %v895 = vld [vmem:[%s350 + $0xec0] sm:$0xff]
        %v896 = vld [vmem:[%s350 + $0xec8] sm:$0xff]
        %v897 = vld [vmem:[%s350 + $0xed0] sm:$0xff]
        %v898 = vld [vmem:[%s350 + $0xed8] sm:$0xff]
        %v899 = vld [vmem:[%s350 + $0xee0] sm:$0xff]
        %v900 = vld [vmem:[%s350 + $0xee8] sm:$0xff]
        %v901 = vld [vmem:[%s350 + $0xef0] sm:$0xff]
        %v902 = vld [vmem:[%s350 + $0xef8] sm:$0xff]
        %v903 = vld [vmem:[%s350 + $0xf00] sm:$0xff]
        %v904 = vld [vmem:[%s350 + $0xf08] sm:$0xff]
        %v905 = vld [vmem:[%s350 + $0xf10] sm:$0xff]
        %v906 = vld [vmem:[%s350 + $0xf18] sm:$0xff]
        %v907 = vld [vmem:[%s350 + $0xf20] sm:$0xff]
        %v908 = vld [vmem:[%s350 + $0xf28] sm:$0xff]
        %v909 = vld [vmem:[%s350 + $0xf30] sm:$0xff]
        %v910 = vld [vmem:[%s350 + $0xf38] sm:$0xff]
        %v911 = vld [vmem:[%s350 + $0xf40] sm:$0xff]
        %v912 = vld [vmem:[%s350 + $0xf48] sm:$0xff]
        %v913 = vld [vmem:[%s350 + $0xf50] sm:$0xff]
        %v914 = vld [vmem:[%s350 + $0xf58] sm:$0xff]
        %v915 = vld [vmem:[%s350 + $0xf60] sm:$0xff]
        %v916 = vld [vmem:[%s350 + $0xf68] sm:$0xff]
        %v917 = vld [vmem:[%s350 + $0xf70] sm:$0xff]
        %v918 = vld [vmem:[%s350 + $0xf78] sm:$0xff]
        %v919 = vld [vmem:[%s350 + $0xf80] sm:$0xff]
        %v920 = vld [vmem:[%s350 + $0xf88] sm:$0xff]
        %v921 = vld [vmem:[%s350 + $0xf90] sm:$0xff]
        %v922 = vld [vmem:[%s350 + $0xf98] sm:$0xff]
        %v923 = vld [vmem:[%s350 + $0xfa0] sm:$0xff]
        %v924 = vld [vmem:[%s350 + $0xfa8] sm:$0xff]
        %v925 = vld [vmem:[%s350 + $0xfb0] sm:$0xff]
        %v926 = vld [vmem:[%s350 + $0xfb8] sm:$0xff]
        %v927 = vld [vmem:[%s350 + $0xfc0] sm:$0xff]
        %v928 = vld [vmem:[%s350 + $0xfc8] sm:$0xff]
        %v929 = vld [vmem:[%s350 + $0xfd0] sm:$0xff]
        %v930 = vld [vmem:[%s350 + $0xfd8] sm:$0xff]
        %v931 = vld [vmem:[%s350 + $0xfe0] sm:$0xff]
        %v932 = vld [vmem:[%s350 + $0xfe8] sm:$0xff]
        %v933 = vld [vmem:[%s350 + $0xff0] sm:$0xff]
        %v934 = vld [vmem:[%s350 + $0xff8] sm:$0xff]
        %935 = vmatprep.subr.mxu0 %v424
        %936 = vmatpush1.msra.mxu0 %v423
        %937 = vmatprep.subr.mxu0 %v426
        %938 = vmatpush1.msra.mxu0 %v425
        %939 = vmatprep.subr.mxu0 %v428
        %940 = vmatpush1.msra.mxu0 %v427
        %941 = vmatprep.subr.mxu0 %v430
        %942 = vmatpush1.msra.mxu0 %v429
        %943 = vmatprep.subr.mxu0 %v432
        %944 = vmatpush1.msra.mxu0 %v431
        %945 = vmatprep.subr.mxu0 %v434
        %946 = vmatpush1.msra.mxu0 %v433
        %947 = vmatprep.subr.mxu0 %v436
        %948 = vmatpush1.msra.mxu0 %v435
        %949 = vmatprep.subr.mxu0 %v438
        %950 = vmatpush1.msra.mxu0 %v437
        %951 = vmatprep.subr.mxu0 %v440
        %952 = vmatpush1.msra.mxu0 %v439
        %953 = vmatprep.subr.mxu0 %v442
        %954 = vmatpush1.msra.mxu0 %v441
        %955 = vmatprep.subr.mxu0 %v444
        %956 = vmatpush1.msra.mxu0 %v443
        %957 = vmatprep.subr.mxu0 %v446
        %958 = vmatpush1.msra.mxu0 %v445
        %959 = vmatprep.subr.mxu0 %v448
        %960 = vmatpush1.msra.mxu0 %v447
        %961 = vmatprep.subr.mxu0 %v450
        %962 = vmatpush1.msra.mxu0 %v449
        %963 = vmatprep.subr.mxu0 %v452
        %964 = vmatpush1.msra.mxu0 %v451
        %965 = vmatprep.subr.mxu0 %v454
        %966 = vmatpush1.msra.mxu0 %v453
        %967 = vmatprep.subr.mxu0 %v456
        %968 = vmatpush1.msra.mxu0 %v455
        %969 = vmatprep.subr.mxu0 %v458
        %970 = vmatpush1.msra.mxu0 %v457
        %971 = vmatprep.subr.mxu0 %v460
        %972 = vmatpush1.msra.mxu0 %v459
        %973 = vmatprep.subr.mxu0 %v462
        %974 = vmatpush1.msra.mxu0 %v461
        %975 = vmatprep.subr.mxu0 %v464
        %976 = vmatpush1.msra.mxu0 %v463
        %977 = vmatprep.subr.mxu0 %v466
        %978 = vmatpush1.msra.mxu0 %v465
        %979 = vmatprep.subr.mxu0 %v468
        %980 = vmatpush1.msra.mxu0 %v467
        %981 = vmatprep.subr.mxu0 %v470
        %982 = vmatpush1.msra.mxu0 %v469
        %983 = vmatprep.subr.mxu0 %v472
        %984 = vmatpush1.msra.mxu0 %v471
        %985 = vmatprep.subr.mxu0 %v474
        %986 = vmatpush1.msra.mxu0 %v473
        %987 = vmatprep.subr.mxu0 %v476
        %988 = vmatpush1.msra.mxu0 %v475
        %989 = vmatprep.subr.mxu0 %v478
        %990 = vmatpush1.msra.mxu0 %v477
        %991 = vmatprep.subr.mxu0 %v480
        %992 = vmatpush1.msra.mxu0 %v479
        %993 = vmatprep.subr.mxu0 %v482
        %994 = vmatpush1.msra.mxu0 %v481
        %995 = vmatprep.subr.mxu0 %v484
        %996 = vmatpush1.msra.mxu0 %v483
        %997 = vmatprep.subr.mxu0 %v486
        %998 = vmatpush1.msra.mxu0 %v485
        %999 = vmatprep.mubr.f32.mxu0 %v408
        %1000 = vmatmul.mubr.f32.gmra.mrb[0].mxu0 %v407
        %v1001 = vpop.f32.mrb[0].mxu0
        %v1002 = vadd.f32 0.0, %v1001
        %v1003 = vpop.f32.mrb[0].mxu0
        %v1004 = vadd.f32 0.0, %v1003
        %1005 = vdwg.mxu0
        %1006 = vmatprep.subr.mxu0 %v488
        %1007 = vmatpush1.msra.mxu0 %v487
        %1008 = vmatprep.subr.mxu0 %v490
        %1009 = vmatpush1.msra.mxu0 %v489
        %1010 = vmatprep.subr.mxu0 %v492
        %1011 = vmatpush1.msra.mxu0 %v491
        %1012 = vmatprep.subr.mxu0 %v494
        %1013 = vmatpush1.msra.mxu0 %v493
        %1014 = vmatprep.subr.mxu0 %v496
        %1015 = vmatpush1.msra.mxu0 %v495
        %1016 = vmatprep.subr.mxu0 %v498
        %1017 = vmatpush1.msra.mxu0 %v497
        %1018 = vmatprep.subr.mxu0 %v500
        %1019 = vmatpush1.msra.mxu0 %v499
        %1020 = vmatprep.subr.mxu0 %v502
        %1021 = vmatpush1.msra.mxu0 %v501
        %1022 = vmatprep.subr.mxu0 %v504
        %1023 = vmatpush1.msra.mxu0 %v503
        %1024 = vmatprep.subr.mxu0 %v506
        %1025 = vmatpush1.msra.mxu0 %v505
        %1026 = vmatprep.subr.mxu0 %v508
        %1027 = vmatpush1.msra.mxu0 %v507
        %1028 = vmatprep.subr.mxu0 %v510
        %1029 = vmatpush1.msra.mxu0 %v509
        %1030 = vmatprep.subr.mxu0 %v512
        %1031 = vmatpush1.msra.mxu0 %v511
        %1032 = vmatprep.subr.mxu0 %v514
        %1033 = vmatpush1.msra.mxu0 %v513
        %1034 = vmatprep.subr.mxu0 %v516
        %1035 = vmatpush1.msra.mxu0 %v515
        %1036 = vmatprep.subr.mxu0 %v518
        %1037 = vmatpush1.msra.mxu0 %v517
        %1038 = vmatprep.subr.mxu0 %v520
        %1039 = vmatpush1.msra.mxu0 %v519
        %1040 = vmatprep.subr.mxu0 %v522
        %1041 = vmatpush1.msra.mxu0 %v521
        %1042 = vmatprep.subr.mxu0 %v524
        %1043 = vmatpush1.msra.mxu0 %v523
        %1044 = vmatprep.subr.mxu0 %v526
        %1045 = vmatpush1.msra.mxu0 %v525
        %1046 = vmatprep.subr.mxu0 %v528
        %1047 = vmatpush1.msra.mxu0 %v527
        %1048 = vmatprep.subr.mxu0 %v530
        %1049 = vmatpush1.msra.mxu0 %v529
        %1050 = vmatprep.subr.mxu0 %v532
        %1051 = vmatpush1.msra.mxu0 %v531
        %1052 = vmatprep.subr.mxu0 %v534
        %1053 = vmatpush1.msra.mxu0 %v533
        %1054 = vmatprep.subr.mxu0 %v536
        %1055 = vmatpush1.msra.mxu0 %v535
        %1056 = vmatprep.subr.mxu0 %v538
        %1057 = vmatpush1.msra.mxu0 %v537
        %1058 = vmatprep.subr.mxu0 %v540
        %1059 = vmatpush1.msra.mxu0 %v539
        %1060 = vmatprep.subr.mxu0 %v542
        %1061 = vmatpush1.msra.mxu0 %v541
        %1062 = vmatprep.subr.mxu0 %v544
        %1063 = vmatpush1.msra.mxu0 %v543
        %1064 = vmatprep.subr.mxu0 %v546
        %1065 = vmatpush1.msra.mxu0 %v545
        %1066 = vmatprep.subr.mxu0 %v548
        %1067 = vmatpush1.msra.mxu0 %v547
        %1068 = vmatprep.subr.mxu0 %v550
        %1069 = vmatpush1.msra.mxu0 %v549
        %1070 = vmatprep.mubr.f32.mxu0 %v410
        %1071 = vmatmul.mubr.f32.gmra.mrb[0].mxu0 %v409
        %v1072 = vpop.f32.mrb[0].mxu0
        %v1073 = vadd.f32 %v1002, %v1072
        %v1074 = vpop.f32.mrb[0].mxu0
        %v1075 = vadd.f32 %v1004, %v1074
        %1076 = vdwg.mxu0
        %1077 = vmatprep.subr.mxu0 %v552
        %1078 = vmatpush1.msra.mxu0 %v551
        %1079 = vmatprep.subr.mxu0 %v554
        %1080 = vmatpush1.msra.mxu0 %v553
        %1081 = vmatprep.subr.mxu0 %v556
        %1082 = vmatpush1.msra.mxu0 %v555
        %1083 = vmatprep.subr.mxu0 %v558
        %1084 = vmatpush1.msra.mxu0 %v557
        %1085 = vmatprep.subr.mxu0 %v560
        %1086 = vmatpush1.msra.mxu0 %v559
        %1087 = vmatprep.subr.mxu0 %v562
        %1088 = vmatpush1.msra.mxu0 %v561
        %1089 = vmatprep.subr.mxu0 %v564
        %1090 = vmatpush1.msra.mxu0 %v563
        %1091 = vmatprep.subr.mxu0 %v566
        %1092 = vmatpush1.msra.mxu0 %v565
        %1093 = vmatprep.subr.mxu0 %v568
        %1094 = vmatpush1.msra.mxu0 %v567
        %1095 = vmatprep.subr.mxu0 %v570
        %1096 = vmatpush1.msra.mxu0 %v569
        %1097 = vmatprep.subr.mxu0 %v572
        %1098 = vmatpush1.msra.mxu0 %v571
        %1099 = vmatprep.subr.mxu0 %v574
        %1100 = vmatpush1.msra.mxu0 %v573
        %1101 = vmatprep.subr.mxu0 %v576
        %1102 = vmatpush1.msra.mxu0 %v575
        %1103 = vmatprep.subr.mxu0 %v578
        %1104 = vmatpush1.msra.mxu0 %v577
        %1105 = vmatprep.subr.mxu0 %v580
        %1106 = vmatpush1.msra.mxu0 %v579
        %1107 = vmatprep.subr.mxu0 %v582
        %1108 = vmatpush1.msra.mxu0 %v581
        %1109 = vmatprep.subr.mxu0 %v584
        %1110 = vmatpush1.msra.mxu0 %v583
        %1111 = vmatprep.subr.mxu0 %v586
        %1112 = vmatpush1.msra.mxu0 %v585
        %1113 = vmatprep.subr.mxu0 %v588
        %1114 = vmatpush1.msra.mxu0 %v587
        %1115 = vmatprep.subr.mxu0 %v590
        %1116 = vmatpush1.msra.mxu0 %v589
        %1117 = vmatprep.subr.mxu0 %v592
        %1118 = vmatpush1.msra.mxu0 %v591
        %1119 = vmatprep.subr.mxu0 %v594
        %1120 = vmatpush1.msra.mxu0 %v593
        %1121 = vmatprep.subr.mxu0 %v596
        %1122 = vmatpush1.msra.mxu0 %v595
        %1123 = vmatprep.subr.mxu0 %v598
        %1124 = vmatpush1.msra.mxu0 %v597
        %1125 = vmatprep.subr.mxu0 %v600
        %1126 = vmatpush1.msra.mxu0 %v599
        %1127 = vmatprep.subr.mxu0 %v602
        %1128 = vmatpush1.msra.mxu0 %v601
        %1129 = vmatprep.subr.mxu0 %v604
        %1130 = vmatpush1.msra.mxu0 %v603
        %1131 = vmatprep.subr.mxu0 %v606
        %1132 = vmatpush1.msra.mxu0 %v605
        %1133 = vmatprep.subr.mxu0 %v608
        %1134 = vmatpush1.msra.mxu0 %v607
        %1135 = vmatprep.subr.mxu0 %v610
        %1136 = vmatpush1.msra.mxu0 %v609
        %1137 = vmatprep.subr.mxu0 %v612
        %1138 = vmatpush1.msra.mxu0 %v611
        %1139 = vmatprep.subr.mxu0 %v614
        %1140 = vmatpush1.msra.mxu0 %v613
        %1141 = vmatprep.mubr.f32.mxu0 %v412
        %1142 = vmatmul.mubr.f32.gmra.mrb[0].mxu0 %v411
        %v1143 = vpop.f32.mrb[0].mxu0
        %v1144 = vadd.f32 %v1073, %v1143
        %v1145 = vpop.f32.mrb[0].mxu0
        %v1146 = vadd.f32 %v1075, %v1145
        %1147 = vdwg.mxu0
        %1148 = vmatprep.subr.mxu0 %v616
        %1149 = vmatpush1.msra.mxu0 %v615
        %1150 = vmatprep.subr.mxu0 %v618
        %1151 = vmatpush1.msra.mxu0 %v617
        %1152 = vmatprep.subr.mxu0 %v620
        %1153 = vmatpush1.msra.mxu0 %v619
        %1154 = vmatprep.subr.mxu0 %v622
        %1155 = vmatpush1.msra.mxu0 %v621
        %1156 = vmatprep.subr.mxu0 %v624
        %1157 = vmatpush1.msra.mxu0 %v623
        %1158 = vmatprep.subr.mxu0 %v626
        %1159 = vmatpush1.msra.mxu0 %v625
        %1160 = vmatprep.subr.mxu0 %v628
        %1161 = vmatpush1.msra.mxu0 %v627
        %1162 = vmatprep.subr.mxu0 %v630
        %1163 = vmatpush1.msra.mxu0 %v629
        %1164 = vmatprep.subr.mxu0 %v632
        %1165 = vmatpush1.msra.mxu0 %v631
        %1166 = vmatprep.subr.mxu0 %v634
        %1167 = vmatpush1.msra.mxu0 %v633
        %1168 = vmatprep.subr.mxu0 %v636
        %1169 = vmatpush1.msra.mxu0 %v635
        %1170 = vmatprep.subr.mxu0 %v638
        %1171 = vmatpush1.msra.mxu0 %v637
        %1172 = vmatprep.subr.mxu0 %v640
        %1173 = vmatpush1.msra.mxu0 %v639
        %1174 = vmatprep.subr.mxu0 %v642
        %1175 = vmatpush1.msra.mxu0 %v641
        %1176 = vmatprep.subr.mxu0 %v644
        %1177 = vmatpush1.msra.mxu0 %v643
        %1178 = vmatprep.subr.mxu0 %v646
        %1179 = vmatpush1.msra.mxu0 %v645
        %1180 = vmatprep.subr.mxu0 %v648
        %1181 = vmatpush1.msra.mxu0 %v647
        %1182 = vmatprep.subr.mxu0 %v650
        %1183 = vmatpush1.msra.mxu0 %v649
        %1184 = vmatprep.subr.mxu0 %v652
        %1185 = vmatpush1.msra.mxu0 %v651
        %1186 = vmatprep.subr.mxu0 %v654
        %1187 = vmatpush1.msra.mxu0 %v653
        %1188 = vmatprep.subr.mxu0 %v656
        %1189 = vmatpush1.msra.mxu0 %v655
        %1190 = vmatprep.subr.mxu0 %v658
        %1191 = vmatpush1.msra.mxu0 %v657
        %1192 = vmatprep.subr.mxu0 %v660
        %1193 = vmatpush1.msra.mxu0 %v659
        %1194 = vmatprep.subr.mxu0 %v662
        %1195 = vmatpush1.msra.mxu0 %v661
        %1196 = vmatprep.subr.mxu0 %v664
        %1197 = vmatpush1.msra.mxu0 %v663
        %1198 = vmatprep.subr.mxu0 %v666
        %1199 = vmatpush1.msra.mxu0 %v665
        %1200 = vmatprep.subr.mxu0 %v668
        %1201 = vmatpush1.msra.mxu0 %v667
        %1202 = vmatprep.subr.mxu0 %v670
        %1203 = vmatpush1.msra.mxu0 %v669
        %1204 = vmatprep.subr.mxu0 %v672
        %1205 = vmatpush1.msra.mxu0 %v671
        %1206 = vmatprep.subr.mxu0 %v674
        %1207 = vmatpush1.msra.mxu0 %v673
        %1208 = vmatprep.subr.mxu0 %v676
        %1209 = vmatpush1.msra.mxu0 %v675
        %1210 = vmatprep.subr.mxu0 %v678
        %1211 = vmatpush1.msra.mxu0 %v677
        %1212 = vmatprep.mubr.f32.mxu0 %v414
        %1213 = vmatmul.mubr.f32.gmra.mrb[0].mxu0 %v413
        %v1214 = vpop.f32.mrb[0].mxu0
        %v1215 = vadd.f32 %v1144, %v1214
        %v1216 = vpop.f32.mrb[0].mxu0
        %v1217 = vadd.f32 %v1146, %v1216
        %1218 = vdwg.mxu0
        %1219 = vmatprep.subr.mxu0 %v680
        %1220 = vmatpush1.msra.mxu0 %v679
        %1221 = vmatprep.subr.mxu0 %v682
        %1222 = vmatpush1.msra.mxu0 %v681
        %1223 = vmatprep.subr.mxu0 %v684
        %1224 = vmatpush1.msra.mxu0 %v683
        %1225 = vmatprep.subr.mxu0 %v686
        %1226 = vmatpush1.msra.mxu0 %v685
        %1227 = vmatprep.subr.mxu0 %v688
        %1228 = vmatpush1.msra.mxu0 %v687
        %1229 = vmatprep.subr.mxu0 %v690
        %1230 = vmatpush1.msra.mxu0 %v689
        %1231 = vmatprep.subr.mxu0 %v692
        %1232 = vmatpush1.msra.mxu0 %v691
        %1233 = vmatprep.subr.mxu0 %v694
        %1234 = vmatpush1.msra.mxu0 %v693
        %1235 = vmatprep.subr.mxu0 %v696
        %1236 = vmatpush1.msra.mxu0 %v695
        %1237 = vmatprep.subr.mxu0 %v698
        %1238 = vmatpush1.msra.mxu0 %v697
        %1239 = vmatprep.subr.mxu0 %v700
        %1240 = vmatpush1.msra.mxu0 %v699
        %1241 = vmatprep.subr.mxu0 %v702
        %1242 = vmatpush1.msra.mxu0 %v701
        %1243 = vmatprep.subr.mxu0 %v704
        %1244 = vmatpush1.msra.mxu0 %v703
        %1245 = vmatprep.subr.mxu0 %v706
        %1246 = vmatpush1.msra.mxu0 %v705
        %1247 = vmatprep.subr.mxu0 %v708
        %1248 = vmatpush1.msra.mxu0 %v707
        %1249 = vmatprep.subr.mxu0 %v710
        %1250 = vmatpush1.msra.mxu0 %v709
        %1251 = vmatprep.subr.mxu0 %v712
        %1252 = vmatpush1.msra.mxu0 %v711
        %1253 = vmatprep.subr.mxu0 %v714
        %1254 = vmatpush1.msra.mxu0 %v713
        %1255 = vmatprep.subr.mxu0 %v716
        %1256 = vmatpush1.msra.mxu0 %v715
        %1257 = vmatprep.subr.mxu0 %v718
        %1258 = vmatpush1.msra.mxu0 %v717
        %1259 = vmatprep.subr.mxu0 %v720
        %1260 = vmatpush1.msra.mxu0 %v719
        %1261 = vmatprep.subr.mxu0 %v722
        %1262 = vmatpush1.msra.mxu0 %v721
        %1263 = vmatprep.subr.mxu0 %v724
        %1264 = vmatpush1.msra.mxu0 %v723
        %1265 = vmatprep.subr.mxu0 %v726
        %1266 = vmatpush1.msra.mxu0 %v725
        %1267 = vmatprep.subr.mxu0 %v728
        %1268 = vmatpush1.msra.mxu0 %v727
        %1269 = vmatprep.subr.mxu0 %v730
        %1270 = vmatpush1.msra.mxu0 %v729
        %1271 = vmatprep.subr.mxu0 %v732
        %1272 = vmatpush1.msra.mxu0 %v731
        %1273 = vmatprep.subr.mxu0 %v734
        %1274 = vmatpush1.msra.mxu0 %v733
        %1275 = vmatprep.subr.mxu0 %v736
        %1276 = vmatpush1.msra.mxu0 %v735
        %1277 = vmatprep.subr.mxu0 %v738
        %1278 = vmatpush1.msra.mxu0 %v737
        %1279 = vmatprep.subr.mxu0 %v740
        %1280 = vmatpush1.msra.mxu0 %v739
        %1281 = vmatprep.subr.mxu0 %v742
        %1282 = vmatpush1.msra.mxu0 %v741
        %1283 = vmatprep.mubr.f32.mxu0 %v416
        %1284 = vmatmul.mubr.f32.gmra.mrb[0].mxu0 %v415
        %v1285 = vpop.f32.mrb[0].mxu0
        %v1286 = vadd.f32 %v1215, %v1285
        %v1287 = vpop.f32.mrb[0].mxu0
        %v1288 = vadd.f32 %v1217, %v1287
        %1289 = vdwg.mxu0
        %1290 = vmatprep.subr.mxu0 %v744
        %1291 = vmatpush1.msra.mxu0 %v743
        %1292 = vmatprep.subr.mxu0 %v746
        %1293 = vmatpush1.msra.mxu0 %v745
        %1294 = vmatprep.subr.mxu0 %v748
        %1295 = vmatpush1.msra.mxu0 %v747
        %1296 = vmatprep.subr.mxu0 %v750
        %1297 = vmatpush1.msra.mxu0 %v749
        %1298 = vmatprep.subr.mxu0 %v752
        %1299 = vmatpush1.msra.mxu0 %v751
        %1300 = vmatprep.subr.mxu0 %v754
        %1301 = vmatpush1.msra.mxu0 %v753
        %1302 = vmatprep.subr.mxu0 %v756
        %1303 = vmatpush1.msra.mxu0 %v755
        %1304 = vmatprep.subr.mxu0 %v758
        %1305 = vmatpush1.msra.mxu0 %v757
        %1306 = vmatprep.subr.mxu0 %v760
        %1307 = vmatpush1.msra.mxu0 %v759
        %1308 = vmatprep.subr.mxu0 %v762
        %1309 = vmatpush1.msra.mxu0 %v761
        %1310 = vmatprep.subr.mxu0 %v764
        %1311 = vmatpush1.msra.mxu0 %v763
        %1312 = vmatprep.subr.mxu0 %v766
        %1313 = vmatpush1.msra.mxu0 %v765
        %1314 = vmatprep.subr.mxu0 %v768
        %1315 = vmatpush1.msra.mxu0 %v767
        %1316 = vmatprep.subr.mxu0 %v770
        %1317 = vmatpush1.msra.mxu0 %v769
        %1318 = vmatprep.subr.mxu0 %v772
        %1319 = vmatpush1.msra.mxu0 %v771
        %1320 = vmatprep.subr.mxu0 %v774
        %1321 = vmatpush1.msra.mxu0 %v773
        %1322 = vmatprep.subr.mxu0 %v776
        %1323 = vmatpush1.msra.mxu0 %v775
        %1324 = vmatprep.subr.mxu0 %v778
        %1325 = vmatpush1.msra.mxu0 %v777
        %1326 = vmatprep.subr.mxu0 %v780
        %1327 = vmatpush1.msra.mxu0 %v779
        %1328 = vmatprep.subr.mxu0 %v782
        %1329 = vmatpush1.msra.mxu0 %v781
        %1330 = vmatprep.subr.mxu0 %v784
        %1331 = vmatpush1.msra.mxu0 %v783
        %1332 = vmatprep.subr.mxu0 %v786
        %1333 = vmatpush1.msra.mxu0 %v785
        %1334 = vmatprep.subr.mxu0 %v788
        %1335 = vmatpush1.msra.mxu0 %v787
        %1336 = vmatprep.subr.mxu0 %v790
        %1337 = vmatpush1.msra.mxu0 %v789
        %1338 = vmatprep.subr.mxu0 %v792
        %1339 = vmatpush1.msra.mxu0 %v791
        %1340 = vmatprep.subr.mxu0 %v794
        %1341 = vmatpush1.msra.mxu0 %v793
        %1342 = vmatprep.subr.mxu0 %v796
        %1343 = vmatpush1.msra.mxu0 %v795
        %1344 = vmatprep.subr.mxu0 %v798
        %1345 = vmatpush1.msra.mxu0 %v797
        %1346 = vmatprep.subr.mxu0 %v800
        %1347 = vmatpush1.msra.mxu0 %v799
        %1348 = vmatprep.subr.mxu0 %v802
        %1349 = vmatpush1.msra.mxu0 %v801
        %1350 = vmatprep.subr.mxu0 %v804
        %1351 = vmatpush1.msra.mxu0 %v803
        %1352 = vmatprep.subr.mxu0 %v806
        %1353 = vmatpush1.msra.mxu0 %v805
        %1354 = vmatprep.mubr.f32.mxu0 %v418
        %1355 = vmatmul.mubr.f32.gmra.mrb[0].mxu0 %v417
        %v1356 = vpop.f32.mrb[0].mxu0
        %v1357 = vadd.f32 %v1286, %v1356
        %v1358 = vpop.f32.mrb[0].mxu0
        %v1359 = vadd.f32 %v1288, %v1358
        %1360 = vdwg.mxu0
        %1361 = vmatprep.subr.mxu0 %v808
        %1362 = vmatpush1.msra.mxu0 %v807
        %1363 = vmatprep.subr.mxu0 %v810
        %1364 = vmatpush1.msra.mxu0 %v809
        %1365 = vmatprep.subr.mxu0 %v812
        %1366 = vmatpush1.msra.mxu0 %v811
        %1367 = vmatprep.subr.mxu0 %v814
        %1368 = vmatpush1.msra.mxu0 %v813
        %1369 = vmatprep.subr.mxu0 %v816
        %1370 = vmatpush1.msra.mxu0 %v815
        %1371 = vmatprep.subr.mxu0 %v818
        %1372 = vmatpush1.msra.mxu0 %v817
        %1373 = vmatprep.subr.mxu0 %v820
        %1374 = vmatpush1.msra.mxu0 %v819
        %1375 = vmatprep.subr.mxu0 %v822
        %1376 = vmatpush1.msra.mxu0 %v821
        %1377 = vmatprep.subr.mxu0 %v824
        %1378 = vmatpush1.msra.mxu0 %v823
        %1379 = vmatprep.subr.mxu0 %v826
        %1380 = vmatpush1.msra.mxu0 %v825
        %1381 = vmatprep.subr.mxu0 %v828
        %1382 = vmatpush1.msra.mxu0 %v827
        %1383 = vmatprep.subr.mxu0 %v830
        %1384 = vmatpush1.msra.mxu0 %v829
        %1385 = vmatprep.subr.mxu0 %v832
        %1386 = vmatpush1.msra.mxu0 %v831
        %1387 = vmatprep.subr.mxu0 %v834
        %1388 = vmatpush1.msra.mxu0 %v833
        %1389 = vmatprep.subr.mxu0 %v836
        %1390 = vmatpush1.msra.mxu0 %v835
        %1391 = vmatprep.subr.mxu0 %v838
        %1392 = vmatpush1.msra.mxu0 %v837
        %1393 = vmatprep.subr.mxu0 %v840
        %1394 = vmatpush1.msra.mxu0 %v839
        %1395 = vmatprep.subr.mxu0 %v842
        %1396 = vmatpush1.msra.mxu0 %v841
        %1397 = vmatprep.subr.mxu0 %v844
        %1398 = vmatpush1.msra.mxu0 %v843
        %1399 = vmatprep.subr.mxu0 %v846
        %1400 = vmatpush1.msra.mxu0 %v845
        %1401 = vmatprep.subr.mxu0 %v848
        %1402 = vmatpush1.msra.mxu0 %v847
        %1403 = vmatprep.subr.mxu0 %v850
        %1404 = vmatpush1.msra.mxu0 %v849
        %1405 = vmatprep.subr.mxu0 %v852
        %1406 = vmatpush1.msra.mxu0 %v851
        %1407 = vmatprep.subr.mxu0 %v854
        %1408 = vmatpush1.msra.mxu0 %v853
        %1409 = vmatprep.subr.mxu0 %v856
        %1410 = vmatpush1.msra.mxu0 %v855
        %1411 = vmatprep.subr.mxu0 %v858
        %1412 = vmatpush1.msra.mxu0 %v857
        %1413 = vmatprep.subr.mxu0 %v860
        %1414 = vmatpush1.msra.mxu0 %v859
        %1415 = vmatprep.subr.mxu0 %v862
        %1416 = vmatpush1.msra.mxu0 %v861
        %1417 = vmatprep.subr.mxu0 %v864
        %1418 = vmatpush1.msra.mxu0 %v863
        %1419 = vmatprep.subr.mxu0 %v866
        %1420 = vmatpush1.msra.mxu0 %v865
        %1421 = vmatprep.subr.mxu0 %v868
        %1422 = vmatpush1.msra.mxu0 %v867
        %1423 = vmatprep.subr.mxu0 %v870
        %1424 = vmatpush1.msra.mxu0 %v869
        %1425 = vmatprep.mubr.f32.mxu0 %v420
        %1426 = vmatmul.mubr.f32.gmra.mrb[0].mxu0 %v419
        %v1427 = vpop.f32.mrb[0].mxu0
        %v1428 = vadd.f32 %v1357, %v1427
        %v1429 = vpop.f32.mrb[0].mxu0
        %v1430 = vadd.f32 %v1359, %v1429
        %1431 = vdwg.mxu0
        %1432 = vmatprep.subr.mxu0 %v872
        %1433 = vmatpush1.msra.mxu0 %v871
        %1434 = vmatprep.subr.mxu0 %v874
        %1435 = vmatpush1.msra.mxu0 %v873
        %1436 = vmatprep.subr.mxu0 %v876
        %1437 = vmatpush1.msra.mxu0 %v875
        %1438 = vmatprep.subr.mxu0 %v878
        %1439 = vmatpush1.msra.mxu0 %v877
        %1440 = vmatprep.subr.mxu0 %v880
        %1441 = vmatpush1.msra.mxu0 %v879
        %1442 = vmatprep.subr.mxu0 %v882
        %1443 = vmatpush1.msra.mxu0 %v881
        %1444 = vmatprep.subr.mxu0 %v884
        %1445 = vmatpush1.msra.mxu0 %v883
        %1446 = vmatprep.subr.mxu0 %v886
        %1447 = vmatpush1.msra.mxu0 %v885
        %1448 = vmatprep.subr.mxu0 %v888
        %1449 = vmatpush1.msra.mxu0 %v887
        %1450 = vmatprep.subr.mxu0 %v890
        %1451 = vmatpush1.msra.mxu0 %v889
        %1452 = vmatprep.subr.mxu0 %v892
        %1453 = vmatpush1.msra.mxu0 %v891
        %1454 = vmatprep.subr.mxu0 %v894
        %1455 = vmatpush1.msra.mxu0 %v893
        %1456 = vmatprep.subr.mxu0 %v896
        %1457 = vmatpush1.msra.mxu0 %v895
        %1458 = vmatprep.subr.mxu0 %v898
        %1459 = vmatpush1.msra.mxu0 %v897
        %1460 = vmatprep.subr.mxu0 %v900
        %1461 = vmatpush1.msra.mxu0 %v899
        %1462 = vmatprep.subr.mxu0 %v902
        %1463 = vmatpush1.msra.mxu0 %v901
        %1464 = vmatprep.subr.mxu0 %v904
        %1465 = vmatpush1.msra.mxu0 %v903
        %1466 = vmatprep.subr.mxu0 %v906
        %1467 = vmatpush1.msra.mxu0 %v905
        %1468 = vmatprep.subr.mxu0 %v908
        %1469 = vmatpush1.msra.mxu0 %v907
        %1470 = vmatprep.subr.mxu0 %v910
        %1471 = vmatpush1.msra.mxu0 %v909
        %1472 = vmatprep.subr.mxu0 %v912
        %1473 = vmatpush1.msra.mxu0 %v911
        %1474 = vmatprep.subr.mxu0 %v914
        %1475 = vmatpush1.msra.mxu0 %v913
        %1476 = vmatprep.subr.mxu0 %v916
        %1477 = vmatpush1.msra.mxu0 %v915
        %1478 = vmatprep.subr.mxu0 %v918
        %1479 = vmatpush1.msra.mxu0 %v917
        %1480 = vmatprep.subr.mxu0 %v920
        %1481 = vmatpush1.msra.mxu0 %v919
        %1482 = vmatprep.subr.mxu0 %v922
        %1483 = vmatpush1.msra.mxu0 %v921
        %1484 = vmatprep.subr.mxu0 %v924
        %1485 = vmatpush1.msra.mxu0 %v923
        %1486 = vmatprep.subr.mxu0 %v926
        %1487 = vmatpush1.msra.mxu0 %v925
        %1488 = vmatprep.subr.mxu0 %v928
        %1489 = vmatpush1.msra.mxu0 %v927
        %1490 = vmatprep.subr.mxu0 %v930
        %1491 = vmatpush1.msra.mxu0 %v929
        %1492 = vmatprep.subr.mxu0 %v932
        %1493 = vmatpush1.msra.mxu0 %v931
        %1494 = vmatprep.subr.mxu0 %v934
        %1495 = vmatpush1.msra.mxu0 %v933
        %1496 = vmatprep.mubr.f32.mxu0 %v422
        %1497 = vmatmul.mubr.f32.gmra.mrb[0].mxu0 %v421
        %v1498 = vpop.f32.mrb[0].mxu0
        %v1499 = vadd.f32 %v1428, %v1498
        %v1500 = vpop.f32.mrb[0].mxu0
        %v1501 = vadd.f32 %v1430, %v1500
        %1502 = vdwg.mxu0
        %v1503 = vadd.f32 %v405, %v1499
        %v1504 = vadd.f32 %v406, %v1501
        %1505 = vst [vmem:[#allocation2] sm:$0xff] %v1503
        %1506 = vst [vmem:[#allocation2 + $0x8] sm:$0xff] %v1504
        %p1507 = scmp.eq.s32.totalorder %s32, 4
        // Predicated region
        $region77: #{tpu_custom_call.1} parent=47 // pred_check
          %p1508 = pneg %p1507
        $region78: #{tpu_custom_call.1} parent=47 // pred_check_branch
          %1510 = sbr.rel (%p1508) target = $region80
        $region79: #{tpu_custom_call.1} parent=47 // pred_region
          %v1511 = vld [vmem:[#allocation2] sm:$0xff]
          %v1512 = vld [vmem:[#allocation2 + $0x8] sm:$0xff]
          %v1513 = vld [vmem:[#allocation8] sm:$0x3]
          %v1515 = vlaneseq
          %v1516 = vshrl.u32 %v1515, 7
          %v1517 = vsub.s32 0, %v1516
          %v1518 = vrot.slane %v1513, %v1517
          %v1519 = vlaneseq
          %v1520 = vshrl.u32 %v1519, 7
          %v1521 = vsub.s32 1, %v1520
          %v1522 = vrot.slane %v1513, %v1521
          %v1525 = vadd.f32 %v1511, %v1518
          %v1526 = vadd.f32 %v1512, %v1522
          %v1527 = vmax.f32 %v1525, 0.0
          %v1528 = vmax.f32 %v1526, 0.0
          %v1529 = vld [vmem:[%s3] sm:$0xff]
          %v1530 = vld [vmem:[%s3 + $0x8] sm:$0xff]
          %v1531 = vld [vmem:[%s3 + $0x10] sm:$0xff]
          %v1532 = vld [vmem:[%s3 + $0x18] sm:$0xff]
          %v1533 = vld [vmem:[%s3 + $0x20] sm:$0xff]
          %v1534 = vld [vmem:[%s3 + $0x28] sm:$0xff]
          %v1535 = vld [vmem:[%s3 + $0x30] sm:$0xff]
          %v1536 = vld [vmem:[%s3 + $0x38] sm:$0xff]
          %v1537 = vld [vmem:[%s3 + $0x40] sm:$0xff]
          %v1538 = vld [vmem:[%s3 + $0x48] sm:$0xff]
          %v1539 = vld [vmem:[%s3 + $0x50] sm:$0xff]
          %v1540 = vld [vmem:[%s3 + $0x58] sm:$0xff]
          %v1541 = vld [vmem:[%s3 + $0x60] sm:$0xff]
          %v1542 = vld [vmem:[%s3 + $0x68] sm:$0xff]
          %v1543 = vld [vmem:[%s3 + $0x70] sm:$0xff]
          %v1544 = vld [vmem:[%s3 + $0x78] sm:$0xff]
          %v1545 = vld [vmem:[%s3 + $0x80] sm:$0xff]
          %v1546 = vld [vmem:[%s3 + $0x88] sm:$0xff]
          %v1547 = vld [vmem:[%s3 + $0x90] sm:$0xff]
          %v1548 = vld [vmem:[%s3 + $0x98] sm:$0xff]
          %v1549 = vld [vmem:[%s3 + $0xa0] sm:$0xff]
          %v1550 = vld [vmem:[%s3 + $0xa8] sm:$0xff]
          %v1551 = vld [vmem:[%s3 + $0xb0] sm:$0xff]
          %v1552 = vld [vmem:[%s3 + $0xb8] sm:$0xff]
          %v1553 = vld [vmem:[%s3 + $0xc0] sm:$0xff]
          %v1554 = vld [vmem:[%s3 + $0xc8] sm:$0xff]
          %v1555 = vld [vmem:[%s3 + $0xd0] sm:$0xff]
          %v1556 = vld [vmem:[%s3 + $0xd8] sm:$0xff]
          %v1557 = vld [vmem:[%s3 + $0xe0] sm:$0xff]
          %v1558 = vld [vmem:[%s3 + $0xe8] sm:$0xff]
          %v1559 = vld [vmem:[%s3 + $0xf0] sm:$0xff]
          %v1560 = vld [vmem:[%s3 + $0xf8] sm:$0xff]
          %v1561 = vld [vmem:[#allocation9] sm:$0x1]
          %v1563 = vlaneseq
          %v1564 = vshrl.u32 %v1563, 7
          %v1565 = vsub.s32 0, %v1564
          %v1566 = vrot.slane %v1561, %v1565
          %1568 = vmatprep.subr.mxu0 0.0
          %1569 = vmatpush1.msra.mxu0 %v1529
          %1570 = vmatprep.subr.mxu0 0.0
          %1571 = vmatpush1.msra.mxu0 %v1530
          %1572 = vmatprep.subr.mxu0 0.0
          %1573 = vmatpush1.msra.mxu0 %v1531
          %1574 = vmatprep.subr.mxu0 0.0
          %1575 = vmatpush1.msra.mxu0 %v1532
          %1576 = vmatprep.subr.mxu0 0.0
          %1577 = vmatpush1.msra.mxu0 %v1533
          %1578 = vmatprep.subr.mxu0 0.0
          %1579 = vmatpush1.msra.mxu0 %v1534
          %1580 = vmatprep.subr.mxu0 0.0
          %1581 = vmatpush1.msra.mxu0 %v1535
          %1582 = vmatprep.subr.mxu0 0.0
          %1583 = vmatpush1.msra.mxu0 %v1536
          %1584 = vmatprep.subr.mxu0 0.0
          %1585 = vmatpush1.msra.mxu0 %v1537
          %1586 = vmatprep.subr.mxu0 0.0
          %1587 = vmatpush1.msra.mxu0 %v1538
          %1588 = vmatprep.subr.mxu0 0.0
          %1589 = vmatpush1.msra.mxu0 %v1539
          %1590 = vmatprep.subr.mxu0 0.0
          %1591 = vmatpush1.msra.mxu0 %v1540
          %1592 = vmatprep.subr.mxu0 0.0
          %1593 = vmatpush1.msra.mxu0 %v1541
          %1594 = vmatprep.subr.mxu0 0.0
          %1595 = vmatpush1.msra.mxu0 %v1542
          %1596 = vmatprep.subr.mxu0 0.0
          %1597 = vmatpush1.msra.mxu0 %v1543
          %1598 = vmatprep.subr.mxu0 0.0
          %1599 = vmatpush1.msra.mxu0 %v1544
          %1600 = vmatprep.subr.mxu0 0.0
          %1601 = vmatpush1.msra.mxu0 %v1545
          %1602 = vmatprep.subr.mxu0 0.0
          %1603 = vmatpush1.msra.mxu0 %v1546
          %1604 = vmatprep.subr.mxu0 0.0
          %1605 = vmatpush1.msra.mxu0 %v1547
          %1606 = vmatprep.subr.mxu0 0.0
          %1607 = vmatpush1.msra.mxu0 %v1548
          %1608 = vmatprep.subr.mxu0 0.0
          %1609 = vmatpush1.msra.mxu0 %v1549
          %1610 = vmatprep.subr.mxu0 0.0
          %1611 = vmatpush1.msra.mxu0 %v1550
          %1612 = vmatprep.subr.mxu0 0.0
          %1613 = vmatpush1.msra.mxu0 %v1551
          %1614 = vmatprep.subr.mxu0 0.0
          %1615 = vmatpush1.msra.mxu0 %v1552
          %1616 = vmatprep.subr.mxu0 0.0
          %1617 = vmatpush1.msra.mxu0 %v1553
          %1618 = vmatprep.subr.mxu0 0.0
          %1619 = vmatpush1.msra.mxu0 %v1554
          %1620 = vmatprep.subr.mxu0 0.0
          %1621 = vmatpush1.msra.mxu0 %v1555
          %1622 = vmatprep.subr.mxu0 0.0
          %1623 = vmatpush1.msra.mxu0 %v1556
          %1624 = vmatprep.subr.mxu0 0.0
          %1625 = vmatpush1.msra.mxu0 %v1557
          %1626 = vmatprep.subr.mxu0 0.0
          %1627 = vmatpush1.msra.mxu0 %v1558
          %1628 = vmatprep.subr.mxu0 0.0
          %1629 = vmatpush1.msra.mxu0 %v1559
          %1630 = vmatprep.subr.mxu0 0.0
          %1631 = vmatpush1.msra.mxu0 %v1560
          %1632 = vmatprep.mubr.f32.mxu0 %v1528
          %1633 = vmatmul.mubr.f32.gmra.mrb[0].mxu0 %v1527
          %v1634 = vpop.f32.mrb[0].mxu0
          %v1635 = vadd.f32 %v1566, %v1634
          %v1636 = vpop.f32.mrb[0].mxu0
          %1637 = vdwg.mxu0
          %v1638 = vmax.f32 %v1635, 0.0
          %v1639 = vld [vmem:[#allocation11] sm:$0xff]
          %v1640 = vld [vmem:[#allocation11 + $0x8] sm:$0xff]
          %v1641 = vld [vmem:[#allocation11 + $0x10] sm:$0xff]
          %v1642 = vld [vmem:[#allocation11 + $0x18] sm:$0xff]
          %v1643 = vld [vmem:[#allocation11 + $0x20] sm:$0xff]
          %v1644 = vld [vmem:[#allocation11 + $0x28] sm:$0xff]
          %v1645 = vld [vmem:[#allocation11 + $0x30] sm:$0xff]
          %v1646 = vld [vmem:[#allocation11 + $0x38] sm:$0xff]
          %v1647 = vld [vmem:[#allocation12] sm:$0x1]
          %v1649 = vlaneseq
          %v1650 = vshrl.u32 %v1649, 7
          %v1651 = vsub.s32 0, %v1650
          %v1652 = vrot.slane %v1647, %v1651
          %vm1654 = vcmask 523264
          %v1656 = vsel %vm1654, %v1638, 0
          %1658 = vmatprep.subr.mxu0 0.0
          %1659 = vmatpush1.msra.mxu0 %v1639
          %1660 = vmatprep.subr.mxu0 0.0
          %1661 = vmatpush1.msra.mxu0 %v1640
          %1662 = vmatprep.subr.mxu0 0.0
          %1663 = vmatpush1.msra.mxu0 %v1641
          %1664 = vmatprep.subr.mxu0 0.0
          %1665 = vmatpush1.msra.mxu0 %v1642
          %1666 = vmatprep.subr.mxu0 0.0
          %1667 = vmatpush1.msra.mxu0 %v1643
          %1668 = vmatprep.subr.mxu0 0.0
          %1669 = vmatpush1.msra.mxu0 %v1644
          %1670 = vmatprep.subr.mxu0 0.0
          %1671 = vmatpush1.msra.mxu0 %v1645
          %1672 = vmatprep.subr.mxu0 0.0
          %1673 = vmatpush1.msra.mxu0 %v1646
          %1674 = vmatprep.subr.mxu0 0.0
          %1675 = vmatpush1.msra.mxu0 0.0
          %1676 = vmatprep.subr.mxu0 0.0
          %1677 = vmatpush1.msra.mxu0 0.0
          %1678 = vmatprep.subr.mxu0 0.0
          %1679 = vmatpush1.msra.mxu0 0.0
          %1680 = vmatprep.subr.mxu0 0.0
          %1681 = vmatpush1.msra.mxu0 0.0
          %1682 = vmatprep.subr.mxu0 0.0
          %1683 = vmatpush1.msra.mxu0 0.0
          %1684 = vmatprep.subr.mxu0 0.0
          %1685 = vmatpush1.msra.mxu0 0.0
          %1686 = vmatprep.subr.mxu0 0.0
          %1687 = vmatpush1.msra.mxu0 0.0
          %1688 = vmatprep.subr.mxu0 0.0
          %1689 = vmatpush1.msra.mxu0 0.0
          %1690 = vmatprep.subr.mxu0 0.0
          %1691 = vmatpush1.msra.mxu0 0.0
          %1692 = vmatprep.subr.mxu0 0.0
          %1693 = vmatpush1.msra.mxu0 0.0
          %1694 = vmatprep.subr.mxu0 0.0
          %1695 = vmatpush1.msra.mxu0 0.0
          %1696 = vmatprep.subr.mxu0 0.0
          %1697 = vmatpush1.msra.mxu0 0.0
          %1698 = vmatprep.subr.mxu0 0.0
          %1699 = vmatpush1.msra.mxu0 0.0
          %1700 = vmatprep.subr.mxu0 0.0
          %1701 = vmatpush1.msra.mxu0 0.0
          %1702 = vmatprep.subr.mxu0 0.0
          %1703 = vmatpush1.msra.mxu0 0.0
          %1704 = vmatprep.subr.mxu0 0.0
          %1705 = vmatpush1.msra.mxu0 0.0
          %1706 = vmatprep.subr.mxu0 0.0
          %1707 = vmatpush1.msra.mxu0 0.0
          %1708 = vmatprep.subr.mxu0 0.0
          %1709 = vmatpush1.msra.mxu0 0.0
          %1710 = vmatprep.subr.mxu0 0.0
          %1711 = vmatpush1.msra.mxu0 0.0
          %1712 = vmatprep.subr.mxu0 0.0
          %1713 = vmatpush1.msra.mxu0 0.0
          %1714 = vmatprep.subr.mxu0 0.0
          %1715 = vmatpush1.msra.mxu0 0.0
          %1716 = vmatprep.subr.mxu0 0.0
          %1717 = vmatpush1.msra.mxu0 0.0
          %1718 = vmatprep.subr.mxu0 0.0
          %1719 = vmatpush1.msra.mxu0 0.0
          %1720 = vmatprep.subr.mxu0 0.0
          %1721 = vmatpush1.msra.mxu0 0.0
          %1722 = vmatprep.mubr.f32.mxu0 0.0
          %1723 = vmatmul.mubr.f32.gmra.mrb[0].mxu0 %v1656
          %v1724 = vpop.f32.mrb[0].mxu0
          %v1725 = vadd.f32 %v1652, %v1724
          %v1726 = vpop.f32.mrb[0].mxu0
          %1727 = vdwg.mxu0
          %1728 = vst [vmem:[#allocation14] sm:$0xff] %v1725
        $region80: #{tpu_custom_call.1} parent=47 // pred_fallthru
          _
        // Predicated region
        $region81: #{tpu_custom_call.1} parent=47 // pred_check
          %p1729 = pneg %p216
        $region82: #{tpu_custom_call.1} parent=47 // pred_check_branch
          %1731 = sbr.rel (%p1729) target = $region84
        $region83: #{tpu_custom_call.1} parent=47 // pred_region
          %s1733 = ssub.s32 128, 128
          %1734 = vsyncadd [#allocation5], %s1733
          %s1735 = smul.addr %s31, 128
          %s1736 = scalar_lea.hbm %s7, %s1735
          %s1738 = sshll.u32 [#allocation14], 4
          %s1739 = int_to_ptr.vmem [resolvable:$true] %s1738
          %1741 = dma.vmem_to_hbm [thread:$0]  %s1739, 128, %s1736, [#allocation5]
        $region84: #{tpu_custom_call.1} parent=47 // pred_fallthru
          _
        // Predicated region
        $region85: #{tpu_custom_call.1} parent=47 // pred_check
          %p1742 = pneg %p216
        $region86: #{tpu_custom_call.1} parent=47 // pred_check_branch
          %1744 = sbr.rel (%p1742) target = $region88
        $region87: #{tpu_custom_call.1} parent=47 // pred_region
          %1745 = dma.done [#allocation5], 128
        $region88: #{tpu_custom_call.1} parent=47 // pred_fallthru
          _
      $region48: #{tpu_custom_call.1} parent=5 // pred_fallthru
        _
      %p1746 = scmp.le.s32.totalorder 2, %s22
      // Predicated region
      $region89: #{tpu_custom_call.1} parent=5 // pred_check
        %p1747 = pneg %p1746
      $region90: #{tpu_custom_call.1} parent=5 // pred_check_branch
        %1749 = sbr.rel (%p1747) target = $region92
      $region91: #{tpu_custom_call.1} parent=5 // pred_region
        %s1750 = ssub.s32 %s22, 2
      $region92: #{tpu_custom_call.1} parent=5 // pred_fallthru
        _
    $region6: #{tpu_custom_call.1} parent=1 // loop_footer
      %s26 = sadd.s32 1, %s22
    $region7: #{tpu_custom_call.1} parent=1 // loop_footer_branch
      %21 = sbr.rel target = $region3
    $region8: #{tpu_custom_call.1} parent=1 // loop_exit
      _
    %1751 = vsyncpa [#allocation4], 1
    %s1752 = scalar_lea.sflag [#allocation4], 1
    %1753 = vsyncpa %s1752, 1
    %1754 = vsyncpa [#allocation7], 1
    %s1755 = scalar_lea.sflag [#allocation7], 1
    %1756 = vsyncpa %s1755, 1
    %1757 = vsyncpa [#allocation10], 1
    %1758 = vsyncpa [#allocation13], 1
    %1759 = vsyncpa [#allocation5], 1
    %s1760 = scalar_lea.sflag [#allocation5], 1
    %1761 = vsyncpa %s1760, 1

</llo_original>
